<compile_context>
chip_gen: v6e
topology: v6e:2x2x1
jax: 0.10.0
libtpu: 0.0.40
codegen_flags: <defaults>
</compile_context>

<pallas_src>
import math

import numpy as np
import jax
import jax.numpy as jnp
from jax import lax
from jax.experimental import pallas as pl
from jax.experimental.pallas import tpu as pltpu

NEG_SLOPE = 0.2

PARAM_ORDER = [
    "w_sh1", "b_sh1", "w_sh2", "b_sh2",
    "w_proj", "b_proj",
    "w_chwz", "b_chwz",
    "w_tr1", "b_tr1", "w_tr2", "b_tr2",
]


def _leaky(v):
    return jnp.where(v >= 0, v, NEG_SLOPE * v)


# ----------------------------- Pallas kernel ------------------------------- #
def make_branch_enhance_kernel(H, W, C):
    HW = H * W
    Ch = C // 2
    f32 = jnp.float32

    def kernel(x_ref,
               w_sh1, b_sh1, w_sh2, b_sh2,
               w_proj, b_proj, w_chwz, b_chwz,
               w_tr1, b_tr1, w_tr2, b_tr2,
               out_ref):
        x0 = x_ref[0].astype(f32)                      # (C, HW), lane axis = HW

        # ---- masks for the 9 shifted 3x3 windows (built once, reused twice) ----
        idx = lax.broadcasted_iota(jnp.int32, (1, HW), 1)
        if (W & (W - 1)) == 0:
            w_idx = jnp.bitwise_and(idx, W - 1)        # column index (W is pow2)
        else:
            w_idx = idx % W
        row_ok = {-1: idx >= W, 0: None, 1: idx < (H - 1) * W}
        col_ok = {-1: w_idx >= 1, 0: None, 1: w_idx <= W - 2}

        def im2col(v):
            """(C, HW) -> (9*C, HW) zero-padded shifted windows, tap-major."""
            blocks = []
            for ky in range(3):
                for kx in range(3):
                    dy, dx = ky - 1, kx - 1
                    s = dy * W + dx                     # flat spatial shift
                    win = v if s == 0 else pltpu.roll(v, (-s) % HW, axis=1)
                    mask = row_ok[dy]
                    cm = col_ok[dx]
                    if mask is None:
                        mask = cm
                    elif cm is not None:
                        mask = jnp.logical_and(mask, cm)
                    if mask is not None:
                        win = jnp.where(mask, win, 0.0)
                    blocks.append(win)
            return jnp.concatenate(blocks, axis=0)      # (9C, HW)

        def conv3x3_grouped(v, wt_ref, b_ref):
            # groups=2 is baked into the block-diagonal (C, 9C) weight.
            patches = im2col(v)
            return jnp.dot(wt_ref[...], patches,
                           preferred_element_type=f32) + b_ref[...]

        # shared: conv3x3(g=2) -> LeakyReLU(0.2) -> conv3x3(g=2)
        h1 = _leaky(conv3x3_grouped(x0, w_sh1, b_sh1))
        xs = conv3x3_grouped(h1, w_sh2, b_sh2)          # (C, HW)

        # fused 1x1 projections: [ch_wv; ch_wq; sp_wv; sp_wq] in a single matmul
        proj = jnp.dot(w_proj[...], xs, preferred_element_type=f32) + b_proj[...]
        ch_wv = proj[0:Ch]                              # (C/2, HW)
        ch_wq = proj[Ch:Ch + 1]                         # (1,   HW)
        sp_wv = proj[Ch + 1:C + 1]                      # (C/2, HW)
        sp_wq = proj[C + 1:C + 1 + Ch]                  # (C/2, HW)

        # ---------------- channel-only attention branch ----------------
        m = jnp.max(ch_wq, axis=-1, keepdims=True)
        e = jnp.exp(ch_wq - m)
        sm = e * pl.reciprocal(jnp.sum(e, axis=-1, keepdims=True), approx=True)
        ch_wz = jnp.sum(ch_wv * sm, axis=-1, keepdims=True)         # (C/2, 1)
        ch_weight = (jnp.dot(w_chwz[...], ch_wz,
                             preferred_element_type=f32) + b_chwz[...])  # (C, 1)
        channel_out = ch_weight * xs                                 # bcast over HW

        # ---------------- spatial-only attention branch ----------------
        q = jnp.sum(sp_wq, axis=-1, keepdims=True) * (1.0 / HW)      # (C/2, 1)
        m2 = jnp.max(q, axis=0, keepdims=True)
        e2 = jnp.exp(q - m2)
        smq = e2 * pl.reciprocal(jnp.sum(e2, axis=0, keepdims=True), approx=True)
        sp_weight = jnp.sum(sp_wv * smq, axis=0, keepdims=True)      # (1, HW)
        spatial_out = sp_weight * xs

        out = spatial_out + channel_out
        # transform: conv1x1 -> LeakyReLU(0.2) -> conv1x1
        t1 = _leaky(jnp.dot(w_tr1[...], out, preferred_element_type=f32) + b_tr1[...])
        t2 = jnp.dot(w_tr2[...], t1, preferred_element_type=f32) + b_tr2[...]
        out = _leaky(t2 + xs)
        out_ref[0] = (x0 + out).astype(out_ref.dtype)

    return kernel


def branch_enhance_pallas(x_nchw, kparams):
    B, C, H, W = x_nchw.shape
    HW = H * W
    x_flat = x_nchw.reshape(B, C, HW)

    in_specs = [pl.BlockSpec((1, C, HW), lambda b: (b, 0, 0))]
    args = [x_flat]
    for name in PARAM_ORDER:
        a = kparams[name]
        in_specs.append(pl.BlockSpec(a.shape, lambda b, nd=a.ndim: (0,) * nd))
        args.append(a)

    out = pl.pallas_call(
        make_branch_enhance_kernel(H, W, C),
        grid=(B,),
        in_specs=in_specs,
        out_specs=pl.BlockSpec((1, C, HW), lambda b: (b, 0, 0)),
        out_shape=jax.ShapeDtypeStruct((B, C, HW), x_nchw.dtype),
        compiler_params=pltpu.CompilerParams(
            dimension_semantics=("parallel",)),
    )(*args)
    return out.reshape(B, C, H, W)


# ------------------------- parameter construction -------------------------- #
def init_torch_params(C, key):
    """Deterministic init mimicking the PyTorch module (kaiming_normal fan_in weights)."""
    keys = iter(jax.random.split(key, 18))

    def kaiming(shape, fan_in):
        return math.sqrt(2.0 / fan_in) * jax.random.normal(next(keys), shape, jnp.float32)

    def bias_u(shape, fan_in):
        bound = 1.0 / math.sqrt(fan_in)
        return jax.random.uniform(next(keys), shape, jnp.float32, -bound, bound)

    fi3 = (C // 2) * 9  # grouped conv fan_in
    p = {}
    p["sh1_w"], p["sh1_b"] = kaiming((C, C // 2, 3, 3), fi3), bias_u((C,), fi3)
    p["sh2_w"], p["sh2_b"] = kaiming((C, C // 2, 3, 3), fi3), bias_u((C,), fi3)
    p["chwv_w"], p["chwv_b"] = kaiming((C // 2, C, 1, 1), C), bias_u((C // 2,), C)
    p["chwq_w"], p["chwq_b"] = kaiming((1, C, 1, 1), C), bias_u((1,), C)
    p["chwz_w"], p["chwz_b"] = kaiming((C, C // 2, 1, 1), C // 2), bias_u((C,), C // 2)
    p["spwv_w"], p["spwv_b"] = kaiming((C // 2, C, 1, 1), C), bias_u((C // 2,), C)
    p["spwq_w"], p["spwq_b"] = kaiming((C // 2, C, 1, 1), C), bias_u((C // 2,), C)
    p["tr1_w"], p["tr1_b"] = kaiming((C, C, 1, 1), C), bias_u((C,), C)
    p["tr2_w"], p["tr2_b"] = kaiming((C, C, 1, 1), C), bias_u((C,), C)
    return p


def grouped_im2col_weight(w):
    """(C_out, C_in//2, 3, 3) grouped (g=2) conv weight -> (C, 9*C) im2col weight,
    K ordered tap-major (tap*C + ci) to match the kernel's patch layout."""
    C = w.shape[0]
    Cg = C // 2
    taps = jnp.zeros((C, 9, C), jnp.float32)                       # (co, tap, ci)
    for g in range(2):
        blk = w[g * Cg:(g + 1) * Cg]                               # (Cg, Cg, 3, 3)
        blk = jnp.transpose(blk, (0, 2, 3, 1)).reshape(Cg, 9, Cg)  # (co, tap, ci)
        taps = taps.at[g * Cg:(g + 1) * Cg, :, g * Cg:(g + 1) * Cg].set(blk)
    return taps.reshape(C, 9 * C)


def w1x1(w):
    """(C_out, C_in, 1, 1) -> (C_out, C_in) for channel-major matmuls."""
    return w[:, :, 0, 0]


def to_kernel_params(p):
    w_proj = jnp.concatenate(
        [w1x1(p["chwv_w"]), w1x1(p["chwq_w"]), w1x1(p["spwv_w"]), w1x1(p["spwq_w"])],
        axis=0)                                                    # (3C/2+1, C)
    b_proj = jnp.concatenate(
        [p["chwv_b"], p["chwq_b"], p["spwv_b"], p["spwq_b"]], axis=0)
    col = lambda b: b.reshape(-1, 1)
    return {
        "w_sh1": grouped_im2col_weight(p["sh1_w"]), "b_sh1": col(p["sh1_b"]),
        "w_sh2": grouped_im2col_weight(p["sh2_w"]), "b_sh2": col(p["sh2_b"]),
        "w_proj": w_proj, "b_proj": col(b_proj),
        "w_chwz": w1x1(p["chwz_w"]), "b_chwz": col(p["chwz_b"]),
        "w_tr1": w1x1(p["tr1_w"]), "b_tr1": col(p["tr1_b"]),
        "w_tr2": w1x1(p["tr2_w"]), "b_tr2": col(p["tr2_b"]),
    }


# ------------------------------ JAX reference ------------------------------ #
def reference_forward(x, p):
    """Pure-JAX NCHW replica of the PyTorch forward (for validation)."""
    B, C, H, W = x.shape

    def conv3x3_g2(v, w, b):
        y = lax.conv_general_dilated(
            v, w, window_strides=(1, 1), padding=((1, 1), (1, 1)),
            dimension_numbers=("NCHW", "OIHW", "NCHW"), feature_group_count=2)
        return y + b.reshape(1, -1, 1, 1)

    def conv1x1(v, w, b):
        return jnp.einsum("bchw,oc->bohw", v, w[:, :, 0, 0]) + b.reshape(1, -1, 1, 1)

    x0 = x
    xs = conv3x3_g2(_leaky(conv3x3_g2(x0, p["sh1_w"], p["sh1_b"])),
                    p["sh2_w"], p["sh2_b"])

    ch_wv = conv1x1(xs, p["chwv_w"], p["chwv_b"]).reshape(B, C // 2, H * W)
    ch_wq = conv1x1(xs, p["chwq_w"], p["chwq_b"]).reshape(B, H * W)
    wq = jax.nn.softmax(ch_wq, axis=1)
    ch_wz = jnp.einsum("bjl,bl->bj", ch_wv, wq)                    # (B, C//2)
    ch_weight = jnp.einsum("bj,oj->bo", ch_wz, p["chwz_w"][:, :, 0, 0]) + p["chwz_b"]
    channel_out = ch_weight[:, :, None, None] * xs

    sp_wv = conv1x1(xs, p["spwv_w"], p["spwv_b"]).reshape(B, C // 2, H * W)
    sp_wq = conv1x1(xs, p["spwq_w"], p["spwq_b"])
    q = jax.nn.softmax(jnp.mean(sp_wq, axis=(2, 3)), axis=1)       # (B, C//2)
    sp_weight = jnp.einsum("bj,bjl->bl", q, sp_wv).reshape(B, 1, H, W)
    spatial_out = sp_weight * xs

    out = spatial_out + channel_out
    out = conv1x1(_leaky(conv1x1(out, p["tr1_w"], p["tr1_b"])), p["tr2_w"], p["tr2_b"])
    out = _leaky(out + xs)
    return x0 + out


# ----------------------------------- main ----------------------------------- #
if __name__ == "__main__":
    B, C, H, W = 2, 4, 16, 16          # PyTorch NCHW input shape
    key = jax.random.PRNGKey(0)
    kx, kparam = jax.random.split(key)
    x = jax.random.normal(kx, (B, C, H, W), jnp.float32)

    torch_params = init_torch_params(C, kparam)
    kernel_params = to_kernel_params(torch_params)

    out = branch_enhance_pallas(x, kernel_params)
    out = jax.block_until_ready(out)

    ref = reference_forward(x, torch_params)
    np.testing.assert_allclose(np.asarray(out), np.asarray(ref), rtol=1e-2, atol=1e-2)
    print("KERNEL_OK")
</pallas_src>

<mosaic_0001>
module attributes {stable_mosaic.version = 11 : i64} {
  func.func @kernel(%arg0: i32, %arg1: memref<1x4x256xf32, #tpu.memory_space<vmem>>, %arg2: memref<4x36xf32, #tpu.memory_space<vmem>>, %arg3: memref<4x1xf32, #tpu.memory_space<vmem>>, %arg4: memref<4x36xf32, #tpu.memory_space<vmem>>, %arg5: memref<4x1xf32, #tpu.memory_space<vmem>>, %arg6: memref<7x4xf32, #tpu.memory_space<vmem>>, %arg7: memref<7x1xf32, #tpu.memory_space<vmem>>, %arg8: memref<4x2xf32, #tpu.memory_space<vmem>>, %arg9: memref<4x1xf32, #tpu.memory_space<vmem>>, %arg10: memref<4x4xf32, #tpu.memory_space<vmem>>, %arg11: memref<4x1xf32, #tpu.memory_space<vmem>>, %arg12: memref<4x4xf32, #tpu.memory_space<vmem>>, %arg13: memref<4x1xf32, #tpu.memory_space<vmem>>, %arg14: memref<1x4x256xf32, #tpu.memory_space<vmem>>) attributes {dimension_semantics = [#tpu.dimension_semantics<parallel>], iteration_bounds = array<i64: 2>, scalar_prefetch = 0 : i64, scratch_operands = 0 : i64, tpu.core_type = #tpu.core_type<tc>, window_params = [{transform_indices = @transform_0, window_bounds = array<i64: 1, 4, 256>}, {pipeline_mode = #tpu.pipeline_mode<synchronous>, transform_indices = @transform_1, window_bounds = array<i64: 4, 36>}, {pipeline_mode = #tpu.pipeline_mode<synchronous>, transform_indices = @transform_2, window_bounds = array<i64: 4, 1>}, {pipeline_mode = #tpu.pipeline_mode<synchronous>, transform_indices = @transform_3, window_bounds = array<i64: 4, 36>}, {pipeline_mode = #tpu.pipeline_mode<synchronous>, transform_indices = @transform_4, window_bounds = array<i64: 4, 1>}, {pipeline_mode = #tpu.pipeline_mode<synchronous>, transform_indices = @transform_5, window_bounds = array<i64: 7, 4>}, {pipeline_mode = #tpu.pipeline_mode<synchronous>, transform_indices = @transform_6, window_bounds = array<i64: 7, 1>}, {pipeline_mode = #tpu.pipeline_mode<synchronous>, transform_indices = @transform_7, window_bounds = array<i64: 4, 2>}, {pipeline_mode = #tpu.pipeline_mode<synchronous>, transform_indices = @transform_8, window_bounds = array<i64: 4, 1>}, {pipeline_mode = #tpu.pipeline_mode<synchronous>, transform_indices = @transform_9, window_bounds = array<i64: 4, 4>}, {pipeline_mode = #tpu.pipeline_mode<synchronous>, transform_indices = @transform_10, window_bounds = array<i64: 4, 1>}, {pipeline_mode = #tpu.pipeline_mode<synchronous>, transform_indices = @transform_11, window_bounds = array<i64: 4, 4>}, {pipeline_mode = #tpu.pipeline_mode<synchronous>, transform_indices = @transform_12, window_bounds = array<i64: 4, 1>}, {transform_indices = @transform_13, window_bounds = array<i64: 1, 4, 256>}]} {
    %c0 = arith.constant 0 : index
    %c0_0 = arith.constant 0 : index
    %c0_1 = arith.constant 0 : index
    %0 = vector.load %arg1[%c0, %c0_0, %c0_1] : memref<1x4x256xf32, #tpu.memory_space<vmem>>, vector<1x4x256xf32>
    %1 = vector.shape_cast %0 : vector<1x4x256xf32> to vector<4x256xf32>
    %2 = tpu.iota {dimensions = array<i32: 1>} : vector<1x256xi32>
    %c15_i32 = arith.constant 15 : i32
    %3 = vector.broadcast %c15_i32 : i32 to vector<1x256xi32>
    %4 = arith.andi %2, %3 : vector<1x256xi32>
    %c16_i32 = arith.constant 16 : i32
    %5 = vector.broadcast %c16_i32 : i32 to vector<1x256xi32>
    %6 = arith.cmpi sge, %2, %5 : vector<1x256xi32>
    %c240_i32 = arith.constant 240 : i32
    %7 = vector.broadcast %c240_i32 : i32 to vector<1x256xi32>
    %8 = arith.cmpi slt, %2, %7 : vector<1x256xi32>
    %c1_i32 = arith.constant 1 : i32
    %9 = vector.broadcast %c1_i32 : i32 to vector<1x256xi32>
    %10 = arith.cmpi sge, %4, %9 : vector<1x256xi32>
    %c14_i32 = arith.constant 14 : i32
    %11 = vector.broadcast %c14_i32 : i32 to vector<1x256xi32>
    %12 = arith.cmpi sle, %4, %11 : vector<1x256xi32>
    %c17_i32 = arith.constant 17 : i32
    %13 = tpu.dynamic_rotate %1 by %c17_i32 dim 1 : vector<4x256xf32>, i32 -> vector<4x256xf32>
    %14 = arith.andi %6, %10 : vector<1x256xi1>
    %cst = arith.constant 0.000000e+00 : f32
    %15 = vector.shape_cast %14 : vector<1x256xi1> to vector<1x256xi1>
    %16 = vector.broadcast %15 : vector<1x256xi1> to vector<4x256xi1>
    %17 = vector.broadcast %cst : f32 to vector<4x256xf32>
    %18 = arith.select %16, %13, %17 : vector<4x256xi1>, vector<4x256xf32>
    %c16_i32_2 = arith.constant 16 : i32
    %19 = tpu.dynamic_rotate %1 by %c16_i32_2 dim 1 : vector<4x256xf32>, i32 -> vector<4x256xf32>
    %cst_3 = arith.constant 0.000000e+00 : f32
    %20 = vector.shape_cast %6 : vector<1x256xi1> to vector<1x256xi1>
    %21 = vector.broadcast %20 : vector<1x256xi1> to vector<4x256xi1>
    %22 = vector.broadcast %cst_3 : f32 to vector<4x256xf32>
    %23 = arith.select %21, %19, %22 : vector<4x256xi1>, vector<4x256xf32>
    %c15_i32_4 = arith.constant 15 : i32
    %24 = tpu.dynamic_rotate %1 by %c15_i32_4 dim 1 : vector<4x256xf32>, i32 -> vector<4x256xf32>
    %25 = arith.andi %6, %12 : vector<1x256xi1>
    %cst_5 = arith.constant 0.000000e+00 : f32
    %26 = vector.shape_cast %25 : vector<1x256xi1> to vector<1x256xi1>
    %27 = vector.broadcast %26 : vector<1x256xi1> to vector<4x256xi1>
    %28 = vector.broadcast %cst_5 : f32 to vector<4x256xf32>
    %29 = arith.select %27, %24, %28 : vector<4x256xi1>, vector<4x256xf32>
    %c1_i32_6 = arith.constant 1 : i32
    %30 = tpu.dynamic_rotate %1 by %c1_i32_6 dim 1 : vector<4x256xf32>, i32 -> vector<4x256xf32>
    %cst_7 = arith.constant 0.000000e+00 : f32
    %31 = vector.shape_cast %10 : vector<1x256xi1> to vector<1x256xi1>
    %32 = vector.broadcast %31 : vector<1x256xi1> to vector<4x256xi1>
    %33 = vector.broadcast %cst_7 : f32 to vector<4x256xf32>
    %34 = arith.select %32, %30, %33 : vector<4x256xi1>, vector<4x256xf32>
    %c255_i32 = arith.constant 255 : i32
    %35 = tpu.dynamic_rotate %1 by %c255_i32 dim 1 : vector<4x256xf32>, i32 -> vector<4x256xf32>
    %cst_8 = arith.constant 0.000000e+00 : f32
    %36 = vector.shape_cast %12 : vector<1x256xi1> to vector<1x256xi1>
    %37 = vector.broadcast %36 : vector<1x256xi1> to vector<4x256xi1>
    %38 = vector.broadcast %cst_8 : f32 to vector<4x256xf32>
    %39 = arith.select %37, %35, %38 : vector<4x256xi1>, vector<4x256xf32>
    %c241_i32 = arith.constant 241 : i32
    %40 = tpu.dynamic_rotate %1 by %c241_i32 dim 1 : vector<4x256xf32>, i32 -> vector<4x256xf32>
    %41 = arith.andi %8, %10 : vector<1x256xi1>
    %cst_9 = arith.constant 0.000000e+00 : f32
    %42 = vector.shape_cast %41 : vector<1x256xi1> to vector<1x256xi1>
    %43 = vector.broadcast %42 : vector<1x256xi1> to vector<4x256xi1>
    %44 = vector.broadcast %cst_9 : f32 to vector<4x256xf32>
    %45 = arith.select %43, %40, %44 : vector<4x256xi1>, vector<4x256xf32>
    %c240_i32_10 = arith.constant 240 : i32
    %46 = tpu.dynamic_rotate %1 by %c240_i32_10 dim 1 : vector<4x256xf32>, i32 -> vector<4x256xf32>
    %cst_11 = arith.constant 0.000000e+00 : f32
    %47 = vector.shape_cast %8 : vector<1x256xi1> to vector<1x256xi1>
    %48 = vector.broadcast %47 : vector<1x256xi1> to vector<4x256xi1>
    %49 = vector.broadcast %cst_11 : f32 to vector<4x256xf32>
    %50 = arith.select %48, %46, %49 : vector<4x256xi1>, vector<4x256xf32>
    %c239_i32 = arith.constant 239 : i32
    %51 = tpu.dynamic_rotate %1 by %c239_i32 dim 1 : vector<4x256xf32>, i32 -> vector<4x256xf32>
    %52 = arith.andi %8, %12 : vector<1x256xi1>
    %cst_12 = arith.constant 0.000000e+00 : f32
    %53 = vector.shape_cast %52 : vector<1x256xi1> to vector<1x256xi1>
    %54 = vector.broadcast %53 : vector<1x256xi1> to vector<4x256xi1>
    %55 = vector.broadcast %cst_12 : f32 to vector<4x256xf32>
    %56 = arith.select %54, %51, %55 : vector<4x256xi1>, vector<4x256xf32>
    %57 = tpu.concatenate %18, %23, %29, %34, %1, %39, %45, %50, %56 in 0 : vector<4x256xf32>, vector<4x256xf32>, vector<4x256xf32>, vector<4x256xf32>, vector<4x256xf32>, vector<4x256xf32>, vector<4x256xf32>, vector<4x256xf32>, vector<4x256xf32> -> vector<36x256xf32>
    %c0_13 = arith.constant 0 : index
    %c0_14 = arith.constant 0 : index
    %58 = vector.load %arg2[%c0_13, %c0_14] : memref<4x36xf32, #tpu.memory_space<vmem>>, vector<4x36xf32>
    %cst_15 = arith.constant dense<0.000000e+00> : vector<4x256xf32>
    %59 = tpu.matmul %58, %57, %cst_15 {dimension_numbers = #tpu.dot_dimension_numbers<[1], [0], [0], [1], [0, 0, 1, 1], [], []>} : vector<4x36xf32>, vector<36x256xf32>, vector<4x256xf32> -> vector<4x256xf32>
    %c0_16 = arith.constant 0 : index
    %c0_17 = arith.constant 0 : index
    %60 = vector.load %arg3[%c0_16, %c0_17] : memref<4x1xf32, #tpu.memory_space<vmem>>, vector<4x1xf32>
    %61 = vector.broadcast %60 : vector<4x1xf32> to vector<4x256xf32>
    %62 = arith.addf %59, %61 : vector<4x256xf32>
    %cst_18 = arith.constant 0.000000e+00 : f32
    %63 = vector.broadcast %cst_18 : f32 to vector<4x256xf32>
    %64 = arith.cmpf oge, %62, %63 : vector<4x256xf32>
    %cst_19 = arith.constant 2.000000e-01 : f32
    %65 = vector.broadcast %cst_19 : f32 to vector<4x256xf32>
    %66 = arith.mulf %65, %62 : vector<4x256xf32>
    %67 = arith.select %64, %62, %66 : vector<4x256xi1>, vector<4x256xf32>
    %c17_i32_20 = arith.constant 17 : i32
    %68 = tpu.dynamic_rotate %67 by %c17_i32_20 dim 1 : vector<4x256xf32>, i32 -> vector<4x256xf32>
    %69 = arith.andi %6, %10 : vector<1x256xi1>
    %cst_21 = arith.constant 0.000000e+00 : f32
    %70 = vector.shape_cast %69 : vector<1x256xi1> to vector<1x256xi1>
    %71 = vector.broadcast %70 : vector<1x256xi1> to vector<4x256xi1>
    %72 = vector.broadcast %cst_21 : f32 to vector<4x256xf32>
    %73 = arith.select %71, %68, %72 : vector<4x256xi1>, vector<4x256xf32>
    %c16_i32_22 = arith.constant 16 : i32
    %74 = tpu.dynamic_rotate %67 by %c16_i32_22 dim 1 : vector<4x256xf32>, i32 -> vector<4x256xf32>
    %cst_23 = arith.constant 0.000000e+00 : f32
    %75 = vector.shape_cast %6 : vector<1x256xi1> to vector<1x256xi1>
    %76 = vector.broadcast %75 : vector<1x256xi1> to vector<4x256xi1>
    %77 = vector.broadcast %cst_23 : f32 to vector<4x256xf32>
    %78 = arith.select %76, %74, %77 : vector<4x256xi1>, vector<4x256xf32>
    %c15_i32_24 = arith.constant 15 : i32
    %79 = tpu.dynamic_rotate %67 by %c15_i32_24 dim 1 : vector<4x256xf32>, i32 -> vector<4x256xf32>
    %80 = arith.andi %6, %12 : vector<1x256xi1>
    %cst_25 = arith.constant 0.000000e+00 : f32
    %81 = vector.shape_cast %80 : vector<1x256xi1> to vector<1x256xi1>
    %82 = vector.broadcast %81 : vector<1x256xi1> to vector<4x256xi1>
    %83 = vector.broadcast %cst_25 : f32 to vector<4x256xf32>
    %84 = arith.select %82, %79, %83 : vector<4x256xi1>, vector<4x256xf32>
    %c1_i32_26 = arith.constant 1 : i32
    %85 = tpu.dynamic_rotate %67 by %c1_i32_26 dim 1 : vector<4x256xf32>, i32 -> vector<4x256xf32>
    %cst_27 = arith.constant 0.000000e+00 : f32
    %86 = vector.shape_cast %10 : vector<1x256xi1> to vector<1x256xi1>
    %87 = vector.broadcast %86 : vector<1x256xi1> to vector<4x256xi1>
    %88 = vector.broadcast %cst_27 : f32 to vector<4x256xf32>
    %89 = arith.select %87, %85, %88 : vector<4x256xi1>, vector<4x256xf32>
    %c255_i32_28 = arith.constant 255 : i32
    %90 = tpu.dynamic_rotate %67 by %c255_i32_28 dim 1 : vector<4x256xf32>, i32 -> vector<4x256xf32>
    %cst_29 = arith.constant 0.000000e+00 : f32
    %91 = vector.shape_cast %12 : vector<1x256xi1> to vector<1x256xi1>
    %92 = vector.broadcast %91 : vector<1x256xi1> to vector<4x256xi1>
    %93 = vector.broadcast %cst_29 : f32 to vector<4x256xf32>
    %94 = arith.select %92, %90, %93 : vector<4x256xi1>, vector<4x256xf32>
    %c241_i32_30 = arith.constant 241 : i32
    %95 = tpu.dynamic_rotate %67 by %c241_i32_30 dim 1 : vector<4x256xf32>, i32 -> vector<4x256xf32>
    %96 = arith.andi %8, %10 : vector<1x256xi1>
    %cst_31 = arith.constant 0.000000e+00 : f32
    %97 = vector.shape_cast %96 : vector<1x256xi1> to vector<1x256xi1>
    %98 = vector.broadcast %97 : vector<1x256xi1> to vector<4x256xi1>
    %99 = vector.broadcast %cst_31 : f32 to vector<4x256xf32>
    %100 = arith.select %98, %95, %99 : vector<4x256xi1>, vector<4x256xf32>
    %c240_i32_32 = arith.constant 240 : i32
    %101 = tpu.dynamic_rotate %67 by %c240_i32_32 dim 1 : vector<4x256xf32>, i32 -> vector<4x256xf32>
    %cst_33 = arith.constant 0.000000e+00 : f32
    %102 = vector.shape_cast %8 : vector<1x256xi1> to vector<1x256xi1>
    %103 = vector.broadcast %102 : vector<1x256xi1> to vector<4x256xi1>
    %104 = vector.broadcast %cst_33 : f32 to vector<4x256xf32>
    %105 = arith.select %103, %101, %104 : vector<4x256xi1>, vector<4x256xf32>
    %c239_i32_34 = arith.constant 239 : i32
    %106 = tpu.dynamic_rotate %67 by %c239_i32_34 dim 1 : vector<4x256xf32>, i32 -> vector<4x256xf32>
    %107 = arith.andi %8, %12 : vector<1x256xi1>
    %cst_35 = arith.constant 0.000000e+00 : f32
    %108 = vector.shape_cast %107 : vector<1x256xi1> to vector<1x256xi1>
    %109 = vector.broadcast %108 : vector<1x256xi1> to vector<4x256xi1>
    %110 = vector.broadcast %cst_35 : f32 to vector<4x256xf32>
    %111 = arith.select %109, %106, %110 : vector<4x256xi1>, vector<4x256xf32>
    %112 = tpu.concatenate %73, %78, %84, %89, %67, %94, %100, %105, %111 in 0 : vector<4x256xf32>, vector<4x256xf32>, vector<4x256xf32>, vector<4x256xf32>, vector<4x256xf32>, vector<4x256xf32>, vector<4x256xf32>, vector<4x256xf32>, vector<4x256xf32> -> vector<36x256xf32>
    %c0_36 = arith.constant 0 : index
    %c0_37 = arith.constant 0 : index
    %113 = vector.load %arg4[%c0_36, %c0_37] : memref<4x36xf32, #tpu.memory_space<vmem>>, vector<4x36xf32>
    %cst_38 = arith.constant dense<0.000000e+00> : vector<4x256xf32>
    %114 = tpu.matmul %113, %112, %cst_38 {dimension_numbers = #tpu.dot_dimension_numbers<[1], [0], [0], [1], [0, 0, 1, 1], [], []>} : vector<4x36xf32>, vector<36x256xf32>, vector<4x256xf32> -> vector<4x256xf32>
    %c0_39 = arith.constant 0 : index
    %c0_40 = arith.constant 0 : index
    %115 = vector.load %arg5[%c0_39, %c0_40] : memref<4x1xf32, #tpu.memory_space<vmem>>, vector<4x1xf32>
    %116 = vector.broadcast %115 : vector<4x1xf32> to vector<4x256xf32>
    %117 = arith.addf %114, %116 : vector<4x256xf32>
    %c0_41 = arith.constant 0 : index
    %c0_42 = arith.constant 0 : index
    %118 = vector.load %arg6[%c0_41, %c0_42] : memref<7x4xf32, #tpu.memory_space<vmem>>, vector<7x4xf32>
    %cst_43 = arith.constant dense<0.000000e+00> : vector<7x256xf32>
    %119 = tpu.matmul %118, %117, %cst_43 {dimension_numbers = #tpu.dot_dimension_numbers<[1], [0], [0], [1], [0, 0, 1, 1], [], []>} : vector<7x4xf32>, vector<4x256xf32>, vector<7x256xf32> -> vector<7x256xf32>
    %c0_44 = arith.constant 0 : index
    %c0_45 = arith.constant 0 : index
    %120 = vector.load %arg7[%c0_44, %c0_45] : memref<7x1xf32, #tpu.memory_space<vmem>>, vector<7x1xf32>
    %121 = vector.broadcast %120 : vector<7x1xf32> to vector<7x256xf32>
    %122 = arith.addf %119, %121 : vector<7x256xf32>
    %123 = vector.extract_strided_slice %122 {offsets = [0, 0], sizes = [2, 256], strides = [1, 1]} : vector<7x256xf32> to vector<2x256xf32>
    %124 = vector.extract_strided_slice %122 {offsets = [2, 0], sizes = [1, 256], strides = [1, 1]} : vector<7x256xf32> to vector<1x256xf32>
    %125 = vector.extract_strided_slice %122 {offsets = [3, 0], sizes = [2, 256], strides = [1, 1]} : vector<7x256xf32> to vector<2x256xf32>
    %126 = vector.extract_strided_slice %122 {offsets = [5, 0], sizes = [2, 256], strides = [1, 1]} : vector<7x256xf32> to vector<2x256xf32>
    %cst_46 = arith.constant dense<0xFF800000> : vector<1xf32>
    %127 = vector.multi_reduction <maximumf>, %124, %cst_46 [1] : vector<1x256xf32> to vector<1xf32>
    %128 = vector.shape_cast %127 : vector<1xf32> to vector<1x1xf32>
    %129 = vector.broadcast %128 : vector<1x1xf32> to vector<1x256xf32>
    %130 = arith.subf %124, %129 : vector<1x256xf32>
    %131 = math.exp %130 : vector<1x256xf32>
    %cst_47 = arith.constant dense<0.000000e+00> : vector<1xf32>
    %132 = vector.multi_reduction <add>, %131, %cst_47 [1] : vector<1x256xf32> to vector<1xf32>
    %133 = vector.shape_cast %132 : vector<1xf32> to vector<1x1xf32>
    %134 = tpu.reciprocal %133 {approx = true} : vector<1x1xf32> -> vector<1x1xf32>
    %135 = vector.broadcast %134 : vector<1x1xf32> to vector<1x256xf32>
    %136 = arith.mulf %131, %135 : vector<1x256xf32>
    %137 = vector.broadcast %136 : vector<1x256xf32> to vector<2x256xf32>
    %138 = arith.mulf %123, %137 : vector<2x256xf32>
    %cst_48 = arith.constant dense<0.000000e+00> : vector<2xf32>
    %139 = vector.multi_reduction <add>, %138, %cst_48 [1] : vector<2x256xf32> to vector<2xf32>
    %140 = vector.shape_cast %139 : vector<2xf32> to vector<2x1xf32>
    %c0_49 = arith.constant 0 : index
    %c0_50 = arith.constant 0 : index
    %141 = vector.load %arg8[%c0_49, %c0_50] : memref<4x2xf32, #tpu.memory_space<vmem>>, vector<4x2xf32>
    %cst_51 = arith.constant dense<0.000000e+00> : vector<4x1xf32>
    %142 = tpu.matmul %141, %140, %cst_51 {dimension_numbers = #tpu.dot_dimension_numbers<[1], [0], [0], [1], [0, 0, 1, 1], [], []>} : vector<4x2xf32>, vector<2x1xf32>, vector<4x1xf32> -> vector<4x1xf32>
    %c0_52 = arith.constant 0 : index
    %c0_53 = arith.constant 0 : index
    %143 = vector.load %arg9[%c0_52, %c0_53] : memref<4x1xf32, #tpu.memory_space<vmem>>, vector<4x1xf32>
    %144 = arith.addf %142, %143 : vector<4x1xf32>
    %145 = vector.broadcast %144 : vector<4x1xf32> to vector<4x256xf32>
    %146 = arith.mulf %145, %117 : vector<4x256xf32>
    %cst_54 = arith.constant dense<0.000000e+00> : vector<2xf32>
    %147 = vector.multi_reduction <add>, %126, %cst_54 [1] : vector<2x256xf32> to vector<2xf32>
    %148 = vector.shape_cast %147 : vector<2xf32> to vector<2x1xf32>
    %cst_55 = arith.constant 3.906250e-03 : f32
    %149 = vector.broadcast %cst_55 : f32 to vector<2x1xf32>
    %150 = arith.mulf %148, %149 : vector<2x1xf32>
    %cst_56 = arith.constant dense<0xFF800000> : vector<1xf32>
    %151 = vector.multi_reduction <maximumf>, %150, %cst_56 [0] : vector<2x1xf32> to vector<1xf32>
    %152 = vector.shape_cast %151 : vector<1xf32> to vector<1x1xf32>
    %153 = vector.broadcast %152 : vector<1x1xf32> to vector<2x1xf32>
    %154 = arith.subf %150, %153 : vector<2x1xf32>
    %155 = math.exp %154 : vector<2x1xf32>
    %cst_57 = arith.constant dense<0.000000e+00> : vector<1xf32>
    %156 = vector.multi_reduction <add>, %155, %cst_57 [0] : vector<2x1xf32> to vector<1xf32>
    %157 = vector.shape_cast %156 : vector<1xf32> to vector<1x1xf32>
    %158 = tpu.reciprocal %157 {approx = true} : vector<1x1xf32> -> vector<1x1xf32>
    %159 = vector.broadcast %158 : vector<1x1xf32> to vector<2x1xf32>
    %160 = arith.mulf %155, %159 : vector<2x1xf32>
    %161 = vector.broadcast %160 : vector<2x1xf32> to vector<2x256xf32>
    %162 = arith.mulf %125, %161 : vector<2x256xf32>
    %cst_58 = arith.constant dense<0.000000e+00> : vector<256xf32>
    %163 = vector.multi_reduction <add>, %162, %cst_58 [0] : vector<2x256xf32> to vector<256xf32>
    %164 = vector.shape_cast %163 : vector<256xf32> to vector<1x256xf32>
    %165 = vector.broadcast %164 : vector<1x256xf32> to vector<4x256xf32>
    %166 = arith.mulf %165, %117 : vector<4x256xf32>
    %167 = arith.addf %166, %146 : vector<4x256xf32>
    %c0_59 = arith.constant 0 : index
    %c0_60 = arith.constant 0 : index
    %168 = vector.load %arg10[%c0_59, %c0_60] : memref<4x4xf32, #tpu.memory_space<vmem>>, vector<4x4xf32>
    %cst_61 = arith.constant dense<0.000000e+00> : vector<4x256xf32>
    %169 = tpu.matmul %168, %167, %cst_61 {dimension_numbers = #tpu.dot_dimension_numbers<[1], [0], [0], [1], [0, 0, 1, 1], [], []>} : vector<4x4xf32>, vector<4x256xf32>, vector<4x256xf32> -> vector<4x256xf32>
    %c0_62 = arith.constant 0 : index
    %c0_63 = arith.constant 0 : index
    %170 = vector.load %arg11[%c0_62, %c0_63] : memref<4x1xf32, #tpu.memory_space<vmem>>, vector<4x1xf32>
    %171 = vector.broadcast %170 : vector<4x1xf32> to vector<4x256xf32>
    %172 = arith.addf %169, %171 : vector<4x256xf32>
    %cst_64 = arith.constant 0.000000e+00 : f32
    %173 = vector.broadcast %cst_64 : f32 to vector<4x256xf32>
    %174 = arith.cmpf oge, %172, %173 : vector<4x256xf32>
    %cst_65 = arith.constant 2.000000e-01 : f32
    %175 = vector.broadcast %cst_65 : f32 to vector<4x256xf32>
    %176 = arith.mulf %175, %172 : vector<4x256xf32>
    %177 = arith.select %174, %172, %176 : vector<4x256xi1>, vector<4x256xf32>
    %c0_66 = arith.constant 0 : index
    %c0_67 = arith.constant 0 : index
    %178 = vector.load %arg12[%c0_66, %c0_67] : memref<4x4xf32, #tpu.memory_space<vmem>>, vector<4x4xf32>
    %cst_68 = arith.constant dense<0.000000e+00> : vector<4x256xf32>
    %179 = tpu.matmul %178, %177, %cst_68 {dimension_numbers = #tpu.dot_dimension_numbers<[1], [0], [0], [1], [0, 0, 1, 1], [], []>} : vector<4x4xf32>, vector<4x256xf32>, vector<4x256xf32> -> vector<4x256xf32>
    %c0_69 = arith.constant 0 : index
    %c0_70 = arith.constant 0 : index
    %180 = vector.load %arg13[%c0_69, %c0_70] : memref<4x1xf32, #tpu.memory_space<vmem>>, vector<4x1xf32>
    %181 = vector.broadcast %180 : vector<4x1xf32> to vector<4x256xf32>
    %182 = arith.addf %179, %181 : vector<4x256xf32>
    %183 = arith.addf %182, %117 : vector<4x256xf32>
    %cst_71 = arith.constant 0.000000e+00 : f32
    %184 = vector.broadcast %cst_71 : f32 to vector<4x256xf32>
    %185 = arith.cmpf oge, %183, %184 : vector<4x256xf32>
    %cst_72 = arith.constant 2.000000e-01 : f32
    %186 = vector.broadcast %cst_72 : f32 to vector<4x256xf32>
    %187 = arith.mulf %186, %183 : vector<4x256xf32>
    %188 = arith.select %185, %183, %187 : vector<4x256xi1>, vector<4x256xf32>
    %189 = arith.addf %1, %188 : vector<4x256xf32>
    %c0_73 = arith.constant 0 : index
    %c0_74 = arith.constant 0 : index
    %c0_75 = arith.constant 0 : index
    %190 = vector.load %arg14[%c0_73, %c0_74, %c0_75] : memref<1x4x256xf32, #tpu.memory_space<vmem>>, vector<1x4x256xf32>
    %191 = vector.shape_cast %190 : vector<1x4x256xf32> to vector<4x256xf32>
    %192 = vector.shape_cast %189 : vector<4x256xf32> to vector<1x4x256xf32>
    tpu.vector_store %arg14[%c0_73, %c0_74, %c0_75], %192 {strides = array<i32>} : memref<1x4x256xf32, #tpu.memory_space<vmem>>, vector<1x4x256xf32>,
    return
  }
  func.func @transform_0(%arg0: i32) -> (i32, i32, i32) {
    %c0_i32 = arith.constant 0 : i32
    %c0_i32_0 = arith.constant 0 : i32
    %c0_i32_1 = arith.constant 0 : i32
    return %arg0, %c0_i32, %c0_i32_0 : i32, i32, i32
  }
  func.func @transform_1(%arg0: i32) -> (i32, i32) {
    %c0_i32 = arith.constant 0 : i32
    %c0_i32_0 = arith.constant 0 : i32
    %c0_i32_1 = arith.constant 0 : i32
    return %c0_i32, %c0_i32_0 : i32, i32
  }
  func.func @transform_2(%arg0: i32) -> (i32, i32) {
    %c0_i32 = arith.constant 0 : i32
    %c0_i32_0 = arith.constant 0 : i32
    %c0_i32_1 = arith.constant 0 : i32
    return %c0_i32, %c0_i32_0 : i32, i32
  }
  func.func @transform_3(%arg0: i32) -> (i32, i32) {
    %c0_i32 = arith.constant 0 : i32
    %c0_i32_0 = arith.constant 0 : i32
    %c0_i32_1 = arith.constant 0 : i32
    return %c0_i32, %c0_i32_0 : i32, i32
  }
  func.func @transform_4(%arg0: i32) -> (i32, i32) {
    %c0_i32 = arith.constant 0 : i32
    %c0_i32_0 = arith.constant 0 : i32
    %c0_i32_1 = arith.constant 0 : i32
    return %c0_i32, %c0_i32_0 : i32, i32
  }
  func.func @transform_5(%arg0: i32) -> (i32, i32) {
    %c0_i32 = arith.constant 0 : i32
    %c0_i32_0 = arith.constant 0 : i32
    %c0_i32_1 = arith.constant 0 : i32
    return %c0_i32, %c0_i32_0 : i32, i32
  }
  func.func @transform_6(%arg0: i32) -> (i32, i32) {
    %c0_i32 = arith.constant 0 : i32
    %c0_i32_0 = arith.constant 0 : i32
    %c0_i32_1 = arith.constant 0 : i32
    return %c0_i32, %c0_i32_0 : i32, i32
  }
  func.func @transform_7(%arg0: i32) -> (i32, i32) {
    %c0_i32 = arith.constant 0 : i32
    %c0_i32_0 = arith.constant 0 : i32
    %c0_i32_1 = arith.constant 0 : i32
    return %c0_i32, %c0_i32_0 : i32, i32
  }
  func.func @transform_8(%arg0: i32) -> (i32, i32) {
    %c0_i32 = arith.constant 0 : i32
    %c0_i32_0 = arith.constant 0 : i32
    %c0_i32_1 = arith.constant 0 : i32
    return %c0_i32, %c0_i32_0 : i32, i32
  }
  func.func @transform_9(%arg0: i32) -> (i32, i32) {
    %c0_i32 = arith.constant 0 : i32
    %c0_i32_0 = arith.constant 0 : i32
    %c0_i32_1 = arith.constant 0 : i32
    return %c0_i32, %c0_i32_0 : i32, i32
  }
  func.func @transform_10(%arg0: i32) -> (i32, i32) {
    %c0_i32 = arith.constant 0 : i32
    %c0_i32_0 = arith.constant 0 : i32
    %c0_i32_1 = arith.constant 0 : i32
    return %c0_i32, %c0_i32_0 : i32, i32
  }
  func.func @transform_11(%arg0: i32) -> (i32, i32) {
    %c0_i32 = arith.constant 0 : i32
    %c0_i32_0 = arith.constant 0 : i32
    %c0_i32_1 = arith.constant 0 : i32
    return %c0_i32, %c0_i32_0 : i32, i32
  }
  func.func @transform_12(%arg0: i32) -> (i32, i32) {
    %c0_i32 = arith.constant 0 : i32
    %c0_i32_0 = arith.constant 0 : i32
    %c0_i32_1 = arith.constant 0 : i32
    return %c0_i32, %c0_i32_0 : i32, i32
  }
  func.func @transform_13(%arg0: i32) -> (i32, i32, i32) {
    %c0_i32 = arith.constant 0 : i32
    %c0_i32_0 = arith.constant 0 : i32
    %c0_i32_1 = arith.constant 0 : i32
    return %arg0, %c0_i32, %c0_i32_0 : i32, i32, i32
  }
}

</mosaic_0001>

<llo_original>
// kernel: tpu_custom_call.1
$region0: #{tpu_custom_call.1}
  #allocation0 [shape = 'u32[]', space=smem, size = 0x4, offset = 0x4, fixed_abs, tag = 'smem constant byte address 0x4 - core index']
  #allocation1 [shape = 'u32[144,128]{1,0:T(1,128)}', space=vmem, size = 0x12000, scoped, tag = 'internal scratch']
  %s0 = inlined_call_operand.vmem [shape: f32[2,4,256], index: 0, kind: input, shape index: {}]
  %s1 = inlined_call_operand.vmem [shape: f32[4,36], index: 1, kind: input, shape index: {}]
  %s2 = inlined_call_operand.vmem [shape: f32[4,1], index: 2, kind: input, shape index: {}]
  %s3 = inlined_call_operand.vmem [shape: f32[4,36], index: 3, kind: input, shape index: {}]
  %s4 = inlined_call_operand.vmem [shape: f32[4,1], index: 4, kind: input, shape index: {}]
  %s5 = inlined_call_operand.vmem [shape: f32[7,4], index: 5, kind: input, shape index: {}]
  %s6 = inlined_call_operand.vmem [shape: f32[7,1], index: 6, kind: input, shape index: {}]
  %s7 = inlined_call_operand.vmem [shape: f32[4,2], index: 7, kind: input, shape index: {}]
  %s8 = inlined_call_operand.vmem [shape: f32[4,1], index: 8, kind: input, shape index: {}]
  %s9 = inlined_call_operand.vmem [shape: f32[4,4], index: 9, kind: input, shape index: {}]
  %s10 = inlined_call_operand.vmem [shape: f32[4,1], index: 10, kind: input, shape index: {}]
  %s11 = inlined_call_operand.vmem [shape: f32[4,4], index: 11, kind: input, shape index: {}]
  %s12 = inlined_call_operand.vmem [shape: f32[4,1], index: 12, kind: input, shape index: {}]
  %s13 = inlined_call_operand.hbm [shape: f32[2,4,256], index: 13, kind: output, shape index: {}]
  %s14 = sld [smem:[#allocation0]]
  $region85: #{tpu_custom_call.1} parent=0
    _
  %s16 = ssub.s32 1, %s14
  %s17 = scalar_select 0, %s16, %s14
  $region1: #{tpu_custom_call.1} parent=0
    #allocation2 [shape = 'u8[8192]{0}', space=vmem, size = 0x2000, scoped, tag = 'output window, operand 0']
    #allocation3 [shape = 's32[2]{0}', space=sflag, size = 0x8, scoped, tag = 'scoped memory for tpu_custom_call.1']
    %18 = vsyncpa [#allocation3], 0
    %s19 = scalar_lea.sflag [#allocation3], 1
    %20 = vsyncpa %s19, 0
    loop: start=0, step=1, limit=4
    $region2: #{tpu_custom_call.1} parent=1 // loop_pre_header
      _
    $region3: #{tpu_custom_call.1} parent=1 // loop_header
      %s22 = sphi 0, %s26
      %p23 = scmp.ge.s32.totalorder %s22, 4
      %s32 = sphi 0, %s34
      %s35 = sphi 0, %s32
      %s36 = sphi 0, %s35
      %s52 = sphi 0, %s36
      %s56 = sphi 0, %s56
      %s58 = sphi 0, %s56
      %s59 = sphi 0, %s58
      %s73 = sphi 0, %s59
      %s77 = sphi 0, %s77
      %s79 = sphi 0, %s77
      %s80 = sphi 0, %s79
      %s94 = sphi 0, %s80
      %s98 = sphi 0, %s98
      %s100 = sphi 0, %s98
      %s101 = sphi 0, %s100
      %s115 = sphi 0, %s101
      %s119 = sphi 0, %s119
      %s121 = sphi 0, %s119
      %s122 = sphi 0, %s121
      %s136 = sphi 0, %s122
      %s140 = sphi 0, %s140
      %s142 = sphi 0, %s140
      %s143 = sphi 0, %s142
      %s157 = sphi 0, %s143
      %s161 = sphi 0, %s161
      %s163 = sphi 0, %s161
      %s164 = sphi 0, %s163
      %s178 = sphi 0, %s164
      %s182 = sphi 0, %s182
      %s184 = sphi 0, %s182
      %s185 = sphi 0, %s184
      %s199 = sphi 0, %s185
      %s203 = sphi 0, %s203
      %s205 = sphi 0, %s203
      %s206 = sphi 0, %s205
      %s220 = sphi 0, %s206
      %s224 = sphi 0, %s224
      %s226 = sphi 0, %s224
      %s227 = sphi 0, %s226
      %s241 = sphi 0, %s227
      %s245 = sphi 0, %s245
      %s247 = sphi 0, %s245
      %s248 = sphi 0, %s247
      %s262 = sphi 0, %s248
      %s266 = sphi 0, %s266
      %s268 = sphi 0, %s266
      %s269 = sphi 0, %s268
      %s283 = sphi 0, %s269
      %s287 = sphi 0, %s287
      %s289 = sphi 0, %s287
      %s290 = sphi 0, %s289
      %s304 = sphi 0, %s290
      %s310 = sphi 0, %s312
      %s313 = sphi 0, %s310
      %s314 = sphi 0, %s313
      %s330 = sphi 0, %s314
    $region4: #{tpu_custom_call.1} parent=1 // loop_header_branch
      %25 = sbr.rel (%p23) target = $region8
    $region5: #{tpu_custom_call.1} parent=1 // loop_body
      %s27 = ssub.s32 %s22, 1
      %s28 = ssub.s32 %s22, 2
      %s29 = sadd.s32 %s22, 1
      %s30 = ssub.s32 %s22, %s29
      %p31 = scmp.eq.s32.totalorder %s30, 0
      %s33 = sadd.s32 %s32, 1
      %s34 = scalar_select %p31, %s32, %s33
      %p37 = pneg %p31
      %p38 = scmp.eq.s32.totalorder %s22, 1
      %p39 = por %p37, %p38
      %p40 = scmp.ne.s32.totalorder %s32, %s35
      %p41 = scmp.eq.s32.totalorder %s22, 0
      %p42 = por %p40, %p41
      %p43 = scmp.ne.s32.totalorder %s32, %s35
      %p44 = scmp.eq.s32.totalorder %s27, 1
      %p45 = por %p43, %p44
      %p46 = scmp.ne.s32.totalorder %s35, %s36
      %p47 = scmp.eq.s32.totalorder %s27, 0
      %p48 = por %p46, %p47
      %p49 = scmp.ne.s32.totalorder %s35, %s36
      %p50 = scmp.eq.s32.totalorder %s28, 1
      %p51 = por %p49, %p50
      %p53 = scmp.ne.s32.totalorder %s36, %s52
      %p54 = scmp.eq.s32.totalorder %s28, 0
      %p55 = por %p53, %p54
      %s57 = sadd.s32 %s56, 1
      %p60 = scmp.eq.s32.totalorder %s22, 1
      %p61 = scmp.ne.s32.totalorder %s56, %s58
      %p62 = scmp.eq.s32.totalorder %s22, 0
      %p63 = por %p61, %p62
      %p64 = scmp.ne.s32.totalorder %s56, %s58
      %p65 = scmp.eq.s32.totalorder %s27, 1
      %p66 = por %p64, %p65
      %p67 = scmp.ne.s32.totalorder %s58, %s59
      %p68 = scmp.eq.s32.totalorder %s27, 0
      %p69 = por %p67, %p68
      %p70 = scmp.ne.s32.totalorder %s58, %s59
      %p71 = scmp.eq.s32.totalorder %s28, 1
      %p72 = por %p70, %p71
      %p74 = scmp.ne.s32.totalorder %s59, %s73
      %p75 = scmp.eq.s32.totalorder %s28, 0
      %p76 = por %p74, %p75
      %s78 = sadd.s32 %s77, 1
      %p81 = scmp.eq.s32.totalorder %s22, 1
      %p82 = scmp.ne.s32.totalorder %s77, %s79
      %p83 = scmp.eq.s32.totalorder %s22, 0
      %p84 = por %p82, %p83
      %p85 = scmp.ne.s32.totalorder %s77, %s79
      %p86 = scmp.eq.s32.totalorder %s27, 1
      %p87 = por %p85, %p86
      %p88 = scmp.ne.s32.totalorder %s79, %s80
      %p89 = scmp.eq.s32.totalorder %s27, 0
      %p90 = por %p88, %p89
      %p91 = scmp.ne.s32.totalorder %s79, %s80
      %p92 = scmp.eq.s32.totalorder %s28, 1
      %p93 = por %p91, %p92
      %p95 = scmp.ne.s32.totalorder %s80, %s94
      %p96 = scmp.eq.s32.totalorder %s28, 0
      %p97 = por %p95, %p96
      %s99 = sadd.s32 %s98, 1
      %p102 = scmp.eq.s32.totalorder %s22, 1
      %p103 = scmp.ne.s32.totalorder %s98, %s100
      %p104 = scmp.eq.s32.totalorder %s22, 0
      %p105 = por %p103, %p104
      %p106 = scmp.ne.s32.totalorder %s98, %s100
      %p107 = scmp.eq.s32.totalorder %s27, 1
      %p108 = por %p106, %p107
      %p109 = scmp.ne.s32.totalorder %s100, %s101
      %p110 = scmp.eq.s32.totalorder %s27, 0
      %p111 = por %p109, %p110
      %p112 = scmp.ne.s32.totalorder %s100, %s101
      %p113 = scmp.eq.s32.totalorder %s28, 1
      %p114 = por %p112, %p113
      %p116 = scmp.ne.s32.totalorder %s101, %s115
      %p117 = scmp.eq.s32.totalorder %s28, 0
      %p118 = por %p116, %p117
      %s120 = sadd.s32 %s119, 1
      %p123 = scmp.eq.s32.totalorder %s22, 1
      %p124 = scmp.ne.s32.totalorder %s119, %s121
      %p125 = scmp.eq.s32.totalorder %s22, 0
      %p126 = por %p124, %p125
      %p127 = scmp.ne.s32.totalorder %s119, %s121
      %p128 = scmp.eq.s32.totalorder %s27, 1
      %p129 = por %p127, %p128
      %p130 = scmp.ne.s32.totalorder %s121, %s122
      %p131 = scmp.eq.s32.totalorder %s27, 0
      %p132 = por %p130, %p131
      %p133 = scmp.ne.s32.totalorder %s121, %s122
      %p134 = scmp.eq.s32.totalorder %s28, 1
      %p135 = por %p133, %p134
      %p137 = scmp.ne.s32.totalorder %s122, %s136
      %p138 = scmp.eq.s32.totalorder %s28, 0
      %p139 = por %p137, %p138
      %s141 = sadd.s32 %s140, 1
      %p144 = scmp.eq.s32.totalorder %s22, 1
      %p145 = scmp.ne.s32.totalorder %s140, %s142
      %p146 = scmp.eq.s32.totalorder %s22, 0
      %p147 = por %p145, %p146
      %p148 = scmp.ne.s32.totalorder %s140, %s142
      %p149 = scmp.eq.s32.totalorder %s27, 1
      %p150 = por %p148, %p149
      %p151 = scmp.ne.s32.totalorder %s142, %s143
      %p152 = scmp.eq.s32.totalorder %s27, 0
      %p153 = por %p151, %p152
      %p154 = scmp.ne.s32.totalorder %s142, %s143
      %p155 = scmp.eq.s32.totalorder %s28, 1
      %p156 = por %p154, %p155
      %p158 = scmp.ne.s32.totalorder %s143, %s157
      %p159 = scmp.eq.s32.totalorder %s28, 0
      %p160 = por %p158, %p159
      %s162 = sadd.s32 %s161, 1
      %p165 = scmp.eq.s32.totalorder %s22, 1
      %p166 = scmp.ne.s32.totalorder %s161, %s163
      %p167 = scmp.eq.s32.totalorder %s22, 0
      %p168 = por %p166, %p167
      %p169 = scmp.ne.s32.totalorder %s161, %s163
      %p170 = scmp.eq.s32.totalorder %s27, 1
      %p171 = por %p169, %p170
      %p172 = scmp.ne.s32.totalorder %s163, %s164
      %p173 = scmp.eq.s32.totalorder %s27, 0
      %p174 = por %p172, %p173
      %p175 = scmp.ne.s32.totalorder %s163, %s164
      %p176 = scmp.eq.s32.totalorder %s28, 1
      %p177 = por %p175, %p176
      %p179 = scmp.ne.s32.totalorder %s164, %s178
      %p180 = scmp.eq.s32.totalorder %s28, 0
      %p181 = por %p179, %p180
      %s183 = sadd.s32 %s182, 1
      %p186 = scmp.eq.s32.totalorder %s22, 1
      %p187 = scmp.ne.s32.totalorder %s182, %s184
      %p188 = scmp.eq.s32.totalorder %s22, 0
      %p189 = por %p187, %p188
      %p190 = scmp.ne.s32.totalorder %s182, %s184
      %p191 = scmp.eq.s32.totalorder %s27, 1
      %p192 = por %p190, %p191
      %p193 = scmp.ne.s32.totalorder %s184, %s185
      %p194 = scmp.eq.s32.totalorder %s27, 0
      %p195 = por %p193, %p194
      %p196 = scmp.ne.s32.totalorder %s184, %s185
      %p197 = scmp.eq.s32.totalorder %s28, 1
      %p198 = por %p196, %p197
      %p200 = scmp.ne.s32.totalorder %s185, %s199
      %p201 = scmp.eq.s32.totalorder %s28, 0
      %p202 = por %p200, %p201
      %s204 = sadd.s32 %s203, 1
      %p207 = scmp.eq.s32.totalorder %s22, 1
      %p208 = scmp.ne.s32.totalorder %s203, %s205
      %p209 = scmp.eq.s32.totalorder %s22, 0
      %p210 = por %p208, %p209
      %p211 = scmp.ne.s32.totalorder %s203, %s205
      %p212 = scmp.eq.s32.totalorder %s27, 1
      %p213 = por %p211, %p212
      %p214 = scmp.ne.s32.totalorder %s205, %s206
      %p215 = scmp.eq.s32.totalorder %s27, 0
      %p216 = por %p214, %p215
      %p217 = scmp.ne.s32.totalorder %s205, %s206
      %p218 = scmp.eq.s32.totalorder %s28, 1
      %p219 = por %p217, %p218
      %p221 = scmp.ne.s32.totalorder %s206, %s220
      %p222 = scmp.eq.s32.totalorder %s28, 0
      %p223 = por %p221, %p222
      %s225 = sadd.s32 %s224, 1
      %p228 = scmp.eq.s32.totalorder %s22, 1
      %p229 = scmp.ne.s32.totalorder %s224, %s226
      %p230 = scmp.eq.s32.totalorder %s22, 0
      %p231 = por %p229, %p230
      %p232 = scmp.ne.s32.totalorder %s224, %s226
      %p233 = scmp.eq.s32.totalorder %s27, 1
      %p234 = por %p232, %p233
      %p235 = scmp.ne.s32.totalorder %s226, %s227
      %p236 = scmp.eq.s32.totalorder %s27, 0
      %p237 = por %p235, %p236
      %p238 = scmp.ne.s32.totalorder %s226, %s227
      %p239 = scmp.eq.s32.totalorder %s28, 1
      %p240 = por %p238, %p239
      %p242 = scmp.ne.s32.totalorder %s227, %s241
      %p243 = scmp.eq.s32.totalorder %s28, 0
      %p244 = por %p242, %p243
      %s246 = sadd.s32 %s245, 1
      %p249 = scmp.eq.s32.totalorder %s22, 1
      %p250 = scmp.ne.s32.totalorder %s245, %s247
      %p251 = scmp.eq.s32.totalorder %s22, 0
      %p252 = por %p250, %p251
      %p253 = scmp.ne.s32.totalorder %s245, %s247
      %p254 = scmp.eq.s32.totalorder %s27, 1
      %p255 = por %p253, %p254
      %p256 = scmp.ne.s32.totalorder %s247, %s248
      %p257 = scmp.eq.s32.totalorder %s27, 0
      %p258 = por %p256, %p257
      %p259 = scmp.ne.s32.totalorder %s247, %s248
      %p260 = scmp.eq.s32.totalorder %s28, 1
      %p261 = por %p259, %p260
      %p263 = scmp.ne.s32.totalorder %s248, %s262
      %p264 = scmp.eq.s32.totalorder %s28, 0
      %p265 = por %p263, %p264
      %s267 = sadd.s32 %s266, 1
      %p270 = scmp.eq.s32.totalorder %s22, 1
      %p271 = scmp.ne.s32.totalorder %s266, %s268
      %p272 = scmp.eq.s32.totalorder %s22, 0
      %p273 = por %p271, %p272
      %p274 = scmp.ne.s32.totalorder %s266, %s268
      %p275 = scmp.eq.s32.totalorder %s27, 1
      %p276 = por %p274, %p275
      %p277 = scmp.ne.s32.totalorder %s268, %s269
      %p278 = scmp.eq.s32.totalorder %s27, 0
      %p279 = por %p277, %p278
      %p280 = scmp.ne.s32.totalorder %s268, %s269
      %p281 = scmp.eq.s32.totalorder %s28, 1
      %p282 = por %p280, %p281
      %p284 = scmp.ne.s32.totalorder %s269, %s283
      %p285 = scmp.eq.s32.totalorder %s28, 0
      %p286 = por %p284, %p285
      %s288 = sadd.s32 %s287, 1
      %p291 = scmp.eq.s32.totalorder %s22, 1
      %p292 = scmp.ne.s32.totalorder %s287, %s289
      %p293 = scmp.eq.s32.totalorder %s22, 0
      %p294 = por %p292, %p293
      %p295 = scmp.ne.s32.totalorder %s287, %s289
      %p296 = scmp.eq.s32.totalorder %s27, 1
      %p297 = por %p295, %p296
      %p298 = scmp.ne.s32.totalorder %s289, %s290
      %p299 = scmp.eq.s32.totalorder %s27, 0
      %p300 = por %p298, %p299
      %p301 = scmp.ne.s32.totalorder %s289, %s290
      %p302 = scmp.eq.s32.totalorder %s28, 1
      %p303 = por %p301, %p302
      %p305 = scmp.ne.s32.totalorder %s290, %s304
      %p306 = scmp.eq.s32.totalorder %s28, 0
      %p307 = por %p305, %p306
      %s308 = ssub.s32 %s22, %s29
      %p309 = scmp.eq.s32.totalorder %s308, 0
      %s311 = sadd.s32 %s310, 1
      %s312 = scalar_select %p309, %s310, %s311
      %p315 = pneg %p309
      %p316 = scmp.eq.s32.totalorder %s22, 1
      %p317 = por %p315, %p316
      %p318 = scmp.ne.s32.totalorder %s310, %s313
      %p319 = scmp.eq.s32.totalorder %s22, 0
      %p320 = por %p318, %p319
      %p321 = scmp.ne.s32.totalorder %s310, %s313
      %p322 = scmp.eq.s32.totalorder %s27, 1
      %p323 = por %p321, %p322
      %p324 = scmp.ne.s32.totalorder %s313, %s314
      %p325 = scmp.eq.s32.totalorder %s27, 0
      %p326 = por %p324, %p325
      %p327 = scmp.ne.s32.totalorder %s313, %s314
      %p328 = scmp.eq.s32.totalorder %s28, 1
      %p329 = por %p327, %p328
      %p331 = scmp.ne.s32.totalorder %s314, %s330
      %p332 = scmp.eq.s32.totalorder %s28, 0
      %p333 = por %p331, %p332
      %p334 = scmp.le.s32.totalorder 1, %s22
      %p335 = scmp.lt.s32.totalorder %s22, 3
      %p336 = pnand %p334, %p335
      %p337 = pneg %p336
      // Predicated region
      $region9: #{tpu_custom_call.1} parent=5 // pred_check
        _
      $region10: #{tpu_custom_call.1} parent=5 // pred_check_branch
        %339 = sbr.rel (%p336) target = $region12
      $region11: #{tpu_custom_call.1} parent=5 // pred_region
        %s340 = ssub.s32 %s22, 1
        // Predicated region
        $region13: #{tpu_custom_call.1} parent=11 // pred_check
          %p341 = pneg %p69
        $region14: #{tpu_custom_call.1} parent=11 // pred_check_branch
          %343 = sbr.rel (%p341) target = $region16
        $region15: #{tpu_custom_call.1} parent=11 // pred_region
          _
        $region16: #{tpu_custom_call.1} parent=11 // pred_fallthru
          _
        // Predicated region
        $region17: #{tpu_custom_call.1} parent=11 // pred_check
          %p344 = pneg %p90
        $region18: #{tpu_custom_call.1} parent=11 // pred_check_branch
          %346 = sbr.rel (%p344) target = $region20
        $region19: #{tpu_custom_call.1} parent=11 // pred_region
          _
        $region20: #{tpu_custom_call.1} parent=11 // pred_fallthru
          _
        // Predicated region
        $region21: #{tpu_custom_call.1} parent=11 // pred_check
          %p347 = pneg %p111
        $region22: #{tpu_custom_call.1} parent=11 // pred_check_branch
          %349 = sbr.rel (%p347) target = $region24
        $region23: #{tpu_custom_call.1} parent=11 // pred_region
          _
        $region24: #{tpu_custom_call.1} parent=11 // pred_fallthru
          _
        // Predicated region
        $region25: #{tpu_custom_call.1} parent=11 // pred_check
          %p350 = pneg %p132
        $region26: #{tpu_custom_call.1} parent=11 // pred_check_branch
          %352 = sbr.rel (%p350) target = $region28
        $region27: #{tpu_custom_call.1} parent=11 // pred_region
          _
        $region28: #{tpu_custom_call.1} parent=11 // pred_fallthru
          _
        // Predicated region
        $region29: #{tpu_custom_call.1} parent=11 // pred_check
          %p353 = pneg %p153
        $region30: #{tpu_custom_call.1} parent=11 // pred_check_branch
          %355 = sbr.rel (%p353) target = $region32
        $region31: #{tpu_custom_call.1} parent=11 // pred_region
          _
        $region32: #{tpu_custom_call.1} parent=11 // pred_fallthru
          _
        // Predicated region
        $region33: #{tpu_custom_call.1} parent=11 // pred_check
          %p356 = pneg %p174
        $region34: #{tpu_custom_call.1} parent=11 // pred_check_branch
          %358 = sbr.rel (%p356) target = $region36
        $region35: #{tpu_custom_call.1} parent=11 // pred_region
          _
        $region36: #{tpu_custom_call.1} parent=11 // pred_fallthru
          _
        // Predicated region
        $region37: #{tpu_custom_call.1} parent=11 // pred_check
          %p359 = pneg %p195
        $region38: #{tpu_custom_call.1} parent=11 // pred_check_branch
          %361 = sbr.rel (%p359) target = $region40
        $region39: #{tpu_custom_call.1} parent=11 // pred_region
          _
        $region40: #{tpu_custom_call.1} parent=11 // pred_fallthru
          _
        // Predicated region
        $region41: #{tpu_custom_call.1} parent=11 // pred_check
          %p362 = pneg %p216
        $region42: #{tpu_custom_call.1} parent=11 // pred_check_branch
          %364 = sbr.rel (%p362) target = $region44
        $region43: #{tpu_custom_call.1} parent=11 // pred_region
          _
        $region44: #{tpu_custom_call.1} parent=11 // pred_fallthru
          _
        // Predicated region
        $region45: #{tpu_custom_call.1} parent=11 // pred_check
          %p365 = pneg %p237
        $region46: #{tpu_custom_call.1} parent=11 // pred_check_branch
          %367 = sbr.rel (%p365) target = $region48
        $region47: #{tpu_custom_call.1} parent=11 // pred_region
          _
        $region48: #{tpu_custom_call.1} parent=11 // pred_fallthru
          _
        // Predicated region
        $region49: #{tpu_custom_call.1} parent=11 // pred_check
          %p368 = pneg %p258
        $region50: #{tpu_custom_call.1} parent=11 // pred_check_branch
          %370 = sbr.rel (%p368) target = $region52
        $region51: #{tpu_custom_call.1} parent=11 // pred_region
          _
        $region52: #{tpu_custom_call.1} parent=11 // pred_fallthru
          _
        // Predicated region
        $region53: #{tpu_custom_call.1} parent=11 // pred_check
          %p371 = pneg %p279
        $region54: #{tpu_custom_call.1} parent=11 // pred_check_branch
          %373 = sbr.rel (%p371) target = $region56
        $region55: #{tpu_custom_call.1} parent=11 // pred_region
          _
        $region56: #{tpu_custom_call.1} parent=11 // pred_fallthru
          _
        // Predicated region
        $region57: #{tpu_custom_call.1} parent=11 // pred_check
          %p374 = pneg %p300
        $region58: #{tpu_custom_call.1} parent=11 // pred_check_branch
          %376 = sbr.rel (%p374) target = $region60
        $region59: #{tpu_custom_call.1} parent=11 // pred_region
          _
        $region60: #{tpu_custom_call.1} parent=11 // pred_fallthru
          _
      $region12: #{tpu_custom_call.1} parent=5 // pred_fallthru
        _
      %p377 = scmp.lt.s32.totalorder %s22, 2
      // Predicated region
      $region61: #{tpu_custom_call.1} parent=5 // pred_check
        %p378 = pneg %p377
      $region62: #{tpu_custom_call.1} parent=5 // pred_check_branch
        %380 = sbr.rel (%p378) target = $region64
      $region63: #{tpu_custom_call.1} parent=5 // pred_region
        // Predicated region
        $region65: #{tpu_custom_call.1} parent=63 // pred_check
          %p381 = pneg %p42
        $region66: #{tpu_custom_call.1} parent=63 // pred_check_branch
          %383 = sbr.rel (%p381) target = $region68
        $region67: #{tpu_custom_call.1} parent=63 // pred_region
          %p384 = scmp.lt.s32.totalorder %s22, 1
          %s385 = scalar_select %p384, %s22, 1
          %s386 = smul.addr %s385, 2
          %s387 = smul.addr %s386, 4
          %s388 = scalar_lea.vmem %s0, %s387
        $region68: #{tpu_custom_call.1} parent=63 // pred_fallthru
          _
      $region64: #{tpu_custom_call.1} parent=5 // pred_fallthru
        _
      %p389 = scmp.le.s32.totalorder 1, %s22
      %p390 = scmp.lt.s32.totalorder %s22, 3
      %p391 = pnand %p389, %p390
      %p392 = pneg %p391
      // Predicated region
      $region69: #{tpu_custom_call.1} parent=5 // pred_check
        _
      $region70: #{tpu_custom_call.1} parent=5 // pred_check_branch
        %394 = sbr.rel (%p391) target = $region72
      $region71: #{tpu_custom_call.1} parent=5 // pred_region
        %s395 = ssub.s32 %s22, 1
        %p396 = scmp.lt.s32.totalorder %s27, 1
        %s397 = scalar_select %p396, %s27, 1
        %s398 = smul.addr %s397, 2
        %s399 = smul.addr %s398, 4
        %s400 = scalar_lea.vmem %s0, %s399
        %p401 = pneg %p48
        %p402 = pneg %p45
        %p403 = pneg %p69
        %p404 = pneg %p66
        %p405 = pneg %p90
        %p406 = pneg %p87
        %p407 = pneg %p111
        %p408 = pneg %p108
        %p409 = pneg %p132
        %p410 = pneg %p129
        %p411 = pneg %p153
        %p412 = pneg %p150
        %p413 = pneg %p174
        %p414 = pneg %p171
        %p415 = pneg %p195
        %p416 = pneg %p192
        %p417 = pneg %p216
        %p418 = pneg %p213
        %p419 = pneg %p237
        %p420 = pneg %p234
        %p421 = pneg %p258
        %p422 = pneg %p255
        %p423 = pneg %p279
        %p424 = pneg %p276
        %p425 = pneg %p300
        %p426 = pneg %p297
        %p427 = pneg %p326
        %p428 = pneg %p323
        %s429 = sand.u32 %s313, 1
        %s430 = scalar_lea.sflag [#allocation3], %s429
        %s431 = sand.u32 %s313, 1
        %s432 = smul.addr %s431, 8
        %s433 = scalar_lea.vmem [#allocation2], %s432
        %p434 = scmp.lt.s32.totalorder %s27, 1
        %s435 = scalar_select %p434, %s27, 1
        %s436 = smul.addr %s435, 2
        %s437 = smul.addr %s436, 4
        %s438 = scalar_lea.vmem %s0, %s437
        %v439 = vld [vmem:[%s438] sm:$0xff]
        %v440 = vlaneseq
        %v441 = vand.u32 %v440, 127
        %v442 = vadd.s32 %v441, 128
        %v443 = vand.u32 %v441, 15
        %v444 = vand.u32 %v442, 15
        %vm445 = vcmp.ge.s32.totalorder %v441, 16
        %vm446 = vcmp.ge.s32.totalorder %v442, 16
        %vm447 = vcmp.lt.s32.totalorder %v441, 240
        %vm448 = vcmp.lt.s32.totalorder %v442, 240
        %vm449 = vcmp.ge.s32.totalorder %v443, 1
        %vm450 = vcmp.ge.s32.totalorder %v444, 1
        %vm451 = vcmp.le.s32.totalorder %v443, 14
        %vm452 = vcmp.le.s32.totalorder %v444, 14
        %v454 = vcombine.high %v439, %v439
        %456 = vrot.lane.b32.xlu0 %v439, 17
        %v457 = vpop.permute.xlu0 %456
        %458 = vrot.lane.b32.xlu0 %v454, 17
        %v459 = vpop.permute.xlu0 %458
        %vm460 = vcmp.lt.s32.totalorder %v441, 17
        %v461 = vsel %vm460, %v457, %v459
        %v462 = vsel %vm460, %v459, %v457
        %vm463 = vmand %vm445, %vm449
        %vm464 = vmand %vm446, %vm450
        %v465 = vsel %vm463, 1, 0
        %v466 = vsel %vm464, 1, 0
        %vm467 = vcmp.eq.s32.totalorder %v465, 1
        %vm468 = vcmp.eq.s32.totalorder %v466, 1
        %v469 = vsel %vm467, %v462, 0.0
        %v470 = vsel %vm468, %v461, 0.0
        %471 = vrot.lane.b32.xlu0 %v439, 16
        %v472 = vpop.permute.xlu0 %471
        %473 = vrot.lane.b32.xlu0 %v454, 16
        %v474 = vpop.permute.xlu0 %473
        %vm475 = vcmp.lt.s32.totalorder %v441, 16
        %v476 = vsel %vm475, %v472, %v474
        %v477 = vsel %vm475, %v474, %v472
        %v478 = vsel %vm445, 1, 0
        %v479 = vsel %vm446, 1, 0
        %vm480 = vcmp.eq.s32.totalorder %v478, 1
        %vm481 = vcmp.eq.s32.totalorder %v479, 1
        %v482 = vsel %vm480, %v477, 0.0
        %v483 = vsel %vm481, %v476, 0.0
        %484 = vrot.lane.b32.xlu0 %v439, 15
        %v485 = vpop.permute.xlu0 %484
        %486 = vrot.lane.b32.xlu0 %v454, 15
        %v487 = vpop.permute.xlu0 %486
        %vm488 = vcmp.lt.s32.totalorder %v441, 15
        %v489 = vsel %vm488, %v485, %v487
        %v490 = vsel %vm488, %v487, %v485
        %vm491 = vmand %vm445, %vm451
        %vm492 = vmand %vm446, %vm452
        %v493 = vsel %vm491, 1, 0
        %v494 = vsel %vm492, 1, 0
        %vm495 = vcmp.eq.s32.totalorder %v493, 1
        %vm496 = vcmp.eq.s32.totalorder %v494, 1
        %v497 = vsel %vm495, %v490, 0.0
        %v498 = vsel %vm496, %v489, 0.0
        %499 = vrot.lane.b32.xlu0 %v439, 1
        %v500 = vpop.permute.xlu0 %499
        %501 = vrot.lane.b32.xlu0 %v454, 1
        %v502 = vpop.permute.xlu0 %501
        %vm503 = vcmp.lt.s32.totalorder %v441, 1
        %v504 = vsel %vm503, %v500, %v502
        %v505 = vsel %vm503, %v502, %v500
        %v506 = vsel %vm449, 1, 0
        %v507 = vsel %vm450, 1, 0
        %vm508 = vcmp.eq.s32.totalorder %v506, 1
        %vm509 = vcmp.eq.s32.totalorder %v507, 1
        %v510 = vsel %vm508, %v505, 0.0
        %v511 = vsel %vm509, %v504, 0.0
        %512 = vrot.lane.b32.xlu0 %v439, 127
        %v513 = vpop.permute.xlu0 %512
        %514 = vrot.lane.b32.xlu0 %v454, 127
        %v515 = vpop.permute.xlu0 %514
        %vm516 = vcmp.lt.s32.totalorder %v441, 127
        %v517 = vsel %vm516, %v513, %v515
        %v518 = vsel %vm516, %v515, %v513
        %v519 = vsel %vm451, 1, 0
        %v520 = vsel %vm452, 1, 0
        %vm521 = vcmp.eq.s32.totalorder %v519, 1
        %vm522 = vcmp.eq.s32.totalorder %v520, 1
        %v523 = vsel %vm521, %v517, 0.0
        %v524 = vsel %vm522, %v518, 0.0
        %525 = vrot.lane.b32.xlu0 %v439, 113
        %v526 = vpop.permute.xlu0 %525
        %527 = vrot.lane.b32.xlu0 %v454, 113
        %v528 = vpop.permute.xlu0 %527
        %vm529 = vcmp.lt.s32.totalorder %v441, 113
        %v530 = vsel %vm529, %v526, %v528
        %v531 = vsel %vm529, %v528, %v526
        %vm532 = vmand %vm447, %vm449
        %vm533 = vmand %vm448, %vm450
        %v534 = vsel %vm532, 1, 0
        %v535 = vsel %vm533, 1, 0
        %vm536 = vcmp.eq.s32.totalorder %v534, 1
        %vm537 = vcmp.eq.s32.totalorder %v535, 1
        %v538 = vsel %vm536, %v530, 0.0
        %v539 = vsel %vm537, %v531, 0.0
        %540 = vrot.lane.b32.xlu0 %v439, 112
        %v541 = vpop.permute.xlu0 %540
        %542 = vrot.lane.b32.xlu0 %v454, 112
        %v543 = vpop.permute.xlu0 %542
        %vm544 = vcmp.lt.s32.totalorder %v441, 112
        %v545 = vsel %vm544, %v541, %v543
        %v546 = vsel %vm544, %v543, %v541
        %v547 = vsel %vm447, 1, 0
        %v548 = vsel %vm448, 1, 0
        %vm549 = vcmp.eq.s32.totalorder %v547, 1
        %vm550 = vcmp.eq.s32.totalorder %v548, 1
        %v551 = vsel %vm549, %v545, 0.0
        %v552 = vsel %vm550, %v546, 0.0
        %553 = vrot.lane.b32.xlu0 %v439, 111
        %v554 = vpop.permute.xlu0 %553
        %555 = vrot.lane.b32.xlu0 %v454, 111
        %v556 = vpop.permute.xlu0 %555
        %vm557 = vcmp.lt.s32.totalorder %v441, 111
        %v558 = vsel %vm557, %v554, %v556
        %v559 = vsel %vm557, %v556, %v554
        %vm560 = vmand %vm447, %vm451
        %vm561 = vmand %vm448, %vm452
        %v562 = vsel %vm560, 1, 0
        %v563 = vsel %vm561, 1, 0
        %vm564 = vcmp.eq.s32.totalorder %v562, 1
        %vm565 = vcmp.eq.s32.totalorder %v563, 1
        %v566 = vsel %vm564, %v558, 0.0
        %v567 = vsel %vm565, %v559, 0.0
        %v570 = vrot.slane %v482, 4
        %v571 = vrot.slane %v483, 4
        %v576 = vrot.slane %v510, 4
        %v577 = vrot.slane %v511, 4
        %v582 = vrot.slane %v523, 4
        %v583 = vrot.slane %v524, 4
        %v588 = vrot.slane %v551, 4
        %v589 = vrot.slane %v552, 4
        %vm592 = vcmask 1043456
        %v593 = vsel %vm592, %v469, %v570
        %v594 = vsel %vm592, %v470, %v571
        %v595 = vsel %vm592, %v497, %v576
        %v596 = vsel %vm592, %v498, %v577
        %v597 = vsel %vm592, %v439, %v582
        %v598 = vsel %vm592, %v454, %v583
        %v599 = vsel %vm592, %v538, %v588
        %v600 = vsel %vm592, %v539, %v589
        %v601 = vld [vmem:[%s1] sm:$0xf]
        %v602 = vld [vmem:[%s2] sm:$0xf]
        %604 = vset.pattern.permute.xlu0 0
        %605 = vperm.xlu0 %604, %v602
        %v606 = vpop.permute.xlu0 %605
        %vm608 = vcmask 293888
        %v610 = vsel %vm608, %v601, 0
        %v613 = vsel %vm592, %v566, 0
        %v616 = vsel %vm592, %v567, 0
        %618 = vmatprep.subr.mxu0 0.0
        %619 = vmatpush1.msra.mxu0 0.0
        %620 = vmatprep.subr.mxu0 0.0
        %621 = vmatpush1.msra.mxu0 0.0
        %622 = vmatprep.subr.mxu0 0.0
        %623 = vmatpush1.msra.mxu0 0.0
        %624 = vmatprep.subr.mxu0 0.0
        %625 = vmatpush1.msra.mxu0 0.0
        %626 = vmatprep.subr.mxu0 0.0
        %627 = vmatpush1.msra.mxu0 0.0
        %628 = vmatprep.subr.mxu0 0.0
        %629 = vmatpush1.msra.mxu0 0.0
        %630 = vmatprep.subr.mxu0 0.0
        %631 = vmatpush1.msra.mxu0 0.0
        %632 = vmatprep.subr.mxu0 0.0
        %633 = vmatpush1.msra.mxu0 0.0
        %634 = vmatprep.subr.mxu0 0.0
        %635 = vmatpush1.msra.mxu0 0.0
        %636 = vmatprep.subr.mxu0 0.0
        %637 = vmatpush1.msra.mxu0 0.0
        %638 = vmatprep.subr.mxu0 0.0
        %639 = vmatpush1.msra.mxu0 0.0
        %640 = vmatprep.subr.mxu0 %v616
        %641 = vmatpush1.msra.mxu0 %v613
        %642 = vmatprep.subr.mxu0 %v600
        %643 = vmatpush1.msra.mxu0 %v599
        %644 = vmatprep.subr.mxu0 %v598
        %645 = vmatpush1.msra.mxu0 %v597
        %646 = vmatprep.subr.mxu0 %v596
        %647 = vmatpush1.msra.mxu0 %v595
        %648 = vmatprep.subr.mxu0 %v594
        %649 = vmatpush1.msra.mxu0 %v593
        %650 = vmatprep.subr.mxu0 0.0
        %651 = vmatpush2.msra.mxu0 0.0
        %652 = vmatprep.subr.mxu0 0.0
        %653 = vmatpush2.msra.mxu0 0.0
        %654 = vmatprep.subr.mxu0 0.0
        %655 = vmatpush2.msra.mxu0 0.0
        %656 = vmatprep.subr.mxu0 0.0
        %657 = vmatpush2.msra.mxu0 0.0
        %658 = vmatprep.subr.mxu0 0.0
        %659 = vmatpush2.msra.mxu0 0.0
        %660 = vmatprep.subr.mxu0 0.0
        %661 = vmatpush2.msra.mxu0 0.0
        %662 = vmatprep.subr.mxu0 0.0
        %663 = vmatpush2.msra.mxu0 0.0
        %664 = vmatprep.subr.mxu0 0.0
        %665 = vmatpush2.msra.mxu0 0.0
        %666 = vmatprep.subr.mxu0 0.0
        %667 = vmatpush2.msra.mxu0 0.0
        %668 = vmatprep.subr.mxu0 0.0
        %669 = vmatpush2.msra.mxu0 0.0
        %670 = vmatprep.subr.mxu0 0.0
        %671 = vmatpush2.msra.mxu0 0.0
        %672 = vmatprep.subr.mxu0 0.0
        %673 = vmatpush2.msra.mxu0 0.0
        %674 = vmatprep.subr.mxu0 0.0
        %675 = vmatpush2.msra.mxu0 0.0
        %676 = vmatprep.subr.mxu0 0.0
        %677 = vmatpush2.msra.mxu0 0.0
        %678 = vmatprep.subr.mxu0 0.0
        %679 = vmatpush2.msra.mxu0 0.0
        %680 = vmatprep.subr.mxu0 0.0
        %681 = vmatpush2.msra.mxu0 0.0
        %682 = vmatprep.mubr.f32.mxu0 0.0
        %683 = vmatmul.mubr.f32.gmra.mxu0 %v610
        %v684 = vpop.f32.mrf.mxu0
        %v685 = vadd.f32 %v606, %v684
        %v686 = vpop.f32.mrf.mxu0
        %v687 = vadd.f32 %v606, %v686
        %688 = vdwg.mxu0
        %vm689 = vcmp.ge.f32.partialorder %v685, 0.0
        %vm690 = vcmp.ge.f32.partialorder %v687, 0.0
        %v691 = vmul.f32 %v685, 0.2
        %v692 = vmul.f32 %v687, 0.2
        %v693 = vsel %vm689, %v685, %v691
        %v694 = vsel %vm690, %v687, %v692
        %695 = vrot.lane.b32.xlu0 %v693, 17
        %v696 = vpop.permute.xlu0 %695
        %697 = vrot.lane.b32.xlu0 %v694, 17
        %v698 = vpop.permute.xlu0 %697
        %v699 = vsel %vm460, %v696, %v698
        %v700 = vsel %vm460, %v698, %v696
        %v701 = vsel %vm467, %v700, 0.0
        %v702 = vsel %vm468, %v699, 0.0
        %703 = vrot.lane.b32.xlu0 %v693, 16
        %v704 = vpop.permute.xlu0 %703
        %705 = vrot.lane.b32.xlu0 %v694, 16
        %v706 = vpop.permute.xlu0 %705
        %v707 = vsel %vm475, %v704, %v706
        %v708 = vsel %vm475, %v706, %v704
        %v709 = vsel %vm480, %v708, 0.0
        %v710 = vsel %vm481, %v707, 0.0
        %711 = vrot.lane.b32.xlu0 %v693, 15
        %v712 = vpop.permute.xlu0 %711
        %713 = vrot.lane.b32.xlu0 %v694, 15
        %v714 = vpop.permute.xlu0 %713
        %v715 = vsel %vm488, %v712, %v714
        %v716 = vsel %vm488, %v714, %v712
        %v717 = vsel %vm495, %v716, 0.0
        %v718 = vsel %vm496, %v715, 0.0
        %719 = vrot.lane.b32.xlu0 %v693, 1
        %v720 = vpop.permute.xlu0 %719
        %721 = vrot.lane.b32.xlu0 %v694, 1
        %v722 = vpop.permute.xlu0 %721
        %v723 = vsel %vm503, %v720, %v722
        %v724 = vsel %vm503, %v722, %v720
        %v725 = vsel %vm508, %v724, 0.0
        %v726 = vsel %vm509, %v723, 0.0
        %727 = vrot.lane.b32.xlu0 %v693, 127
        %v728 = vpop.permute.xlu0 %727
        %729 = vrot.lane.b32.xlu0 %v694, 127
        %v730 = vpop.permute.xlu0 %729
        %v731 = vsel %vm516, %v728, %v730
        %v732 = vsel %vm516, %v730, %v728
        %v733 = vsel %vm521, %v731, 0.0
        %v734 = vsel %vm522, %v732, 0.0
        %735 = vrot.lane.b32.xlu0 %v693, 113
        %v736 = vpop.permute.xlu0 %735
        %737 = vrot.lane.b32.xlu0 %v694, 113
        %v738 = vpop.permute.xlu0 %737
        %v739 = vsel %vm529, %v736, %v738
        %v740 = vsel %vm529, %v738, %v736
        %v741 = vsel %vm536, %v739, 0.0
        %v742 = vsel %vm537, %v740, 0.0
        %743 = vrot.lane.b32.xlu0 %v693, 112
        %v744 = vpop.permute.xlu0 %743
        %745 = vrot.lane.b32.xlu0 %v694, 112
        %v746 = vpop.permute.xlu0 %745
        %v747 = vsel %vm544, %v744, %v746
        %v748 = vsel %vm544, %v746, %v744
        %v749 = vsel %vm549, %v747, 0.0
        %v750 = vsel %vm550, %v748, 0.0
        %751 = vrot.lane.b32.xlu0 %v693, 111
        %v752 = vpop.permute.xlu0 %751
        %753 = vrot.lane.b32.xlu0 %v694, 111
        %v754 = vpop.permute.xlu0 %753
        %v755 = vsel %vm557, %v752, %v754
        %v756 = vsel %vm557, %v754, %v752
        %v757 = vsel %vm564, %v755, 0.0
        %v758 = vsel %vm565, %v756, 0.0
        %v761 = vrot.slane %v709, 4
        %v762 = vrot.slane %v710, 4
        %v767 = vrot.slane %v725, 4
        %v768 = vrot.slane %v726, 4
        %v773 = vrot.slane %v733, 4
        %v774 = vrot.slane %v734, 4
        %v779 = vrot.slane %v749, 4
        %v780 = vrot.slane %v750, 4
        %v783 = vsel %vm592, %v701, %v761
        %v784 = vsel %vm592, %v702, %v762
        %v785 = vsel %vm592, %v717, %v767
        %v786 = vsel %vm592, %v718, %v768
        %v787 = vsel %vm592, %v693, %v773
        %v788 = vsel %vm592, %v694, %v774
        %v789 = vsel %vm592, %v741, %v779
        %v790 = vsel %vm592, %v742, %v780
        %v791 = vld [vmem:[%s3] sm:$0xf]
        %v792 = vld [vmem:[%s4] sm:$0xf]
        %794 = vset.pattern.permute.xlu0 0
        %795 = vperm.xlu0 %794, %v792
        %v796 = vpop.permute.xlu0 %795
        %v799 = vsel %vm608, %v791, 0
        %v802 = vsel %vm592, %v757, 0
        %v805 = vsel %vm592, %v758, 0
        %807 = vmatprep.subr.mxu0 0.0
        %808 = vmatpush1.msra.mxu0 0.0
        %809 = vmatprep.subr.mxu0 0.0
        %810 = vmatpush1.msra.mxu0 0.0
        %811 = vmatprep.subr.mxu0 0.0
        %812 = vmatpush1.msra.mxu0 0.0
        %813 = vmatprep.subr.mxu0 0.0
        %814 = vmatpush1.msra.mxu0 0.0
        %815 = vmatprep.subr.mxu0 0.0
        %816 = vmatpush1.msra.mxu0 0.0
        %817 = vmatprep.subr.mxu0 0.0
        %818 = vmatpush1.msra.mxu0 0.0
        %819 = vmatprep.subr.mxu0 0.0
        %820 = vmatpush1.msra.mxu0 0.0
        %821 = vmatprep.subr.mxu0 0.0
        %822 = vmatpush1.msra.mxu0 0.0
        %823 = vmatprep.subr.mxu0 0.0
        %824 = vmatpush1.msra.mxu0 0.0
        %825 = vmatprep.subr.mxu0 0.0
        %826 = vmatpush1.msra.mxu0 0.0
        %827 = vmatprep.subr.mxu0 0.0
        %828 = vmatpush1.msra.mxu0 0.0
        %829 = vmatprep.subr.mxu0 %v805
        %830 = vmatpush1.msra.mxu0 %v802
        %831 = vmatprep.subr.mxu0 %v790
        %832 = vmatpush1.msra.mxu0 %v789
        %833 = vmatprep.subr.mxu0 %v788
        %834 = vmatpush1.msra.mxu0 %v787
        %835 = vmatprep.subr.mxu0 %v786
        %836 = vmatpush1.msra.mxu0 %v785
        %837 = vmatprep.subr.mxu0 %v784
        %838 = vmatpush1.msra.mxu0 %v783
        %839 = vmatprep.subr.mxu0 0.0
        %840 = vmatpush2.msra.mxu0 0.0
        %841 = vmatprep.subr.mxu0 0.0
        %842 = vmatpush2.msra.mxu0 0.0
        %843 = vmatprep.subr.mxu0 0.0
        %844 = vmatpush2.msra.mxu0 0.0
        %845 = vmatprep.subr.mxu0 0.0
        %846 = vmatpush2.msra.mxu0 0.0
        %847 = vmatprep.subr.mxu0 0.0
        %848 = vmatpush2.msra.mxu0 0.0
        %849 = vmatprep.subr.mxu0 0.0
        %850 = vmatpush2.msra.mxu0 0.0
        %851 = vmatprep.subr.mxu0 0.0
        %852 = vmatpush2.msra.mxu0 0.0
        %853 = vmatprep.subr.mxu0 0.0
        %854 = vmatpush2.msra.mxu0 0.0
        %855 = vmatprep.subr.mxu0 0.0
        %856 = vmatpush2.msra.mxu0 0.0
        %857 = vmatprep.subr.mxu0 0.0
        %858 = vmatpush2.msra.mxu0 0.0
        %859 = vmatprep.subr.mxu0 0.0
        %860 = vmatpush2.msra.mxu0 0.0
        %861 = vmatprep.subr.mxu0 0.0
        %862 = vmatpush2.msra.mxu0 0.0
        %863 = vmatprep.subr.mxu0 0.0
        %864 = vmatpush2.msra.mxu0 0.0
        %865 = vmatprep.subr.mxu0 0.0
        %866 = vmatpush2.msra.mxu0 0.0
        %867 = vmatprep.subr.mxu0 0.0
        %868 = vmatpush2.msra.mxu0 0.0
        %869 = vmatprep.subr.mxu0 0.0
        %870 = vmatpush2.msra.mxu0 0.0
        %871 = vmatprep.mubr.f32.mxu0 0.0
        %872 = vmatmul.mubr.f32.gmra.mxu0 %v799
        %v873 = vpop.f32.mrf.mxu0
        %v874 = vadd.f32 %v796, %v873
        %v875 = vpop.f32.mrf.mxu0
        %v876 = vadd.f32 %v796, %v875
        %877 = vdwg.mxu0
        %v878 = vld [vmem:[%s5] sm:$0x7f]
        %v879 = vld [vmem:[%s6] sm:$0x7f]
        %881 = vset.pattern.permute.xlu0 0
        %882 = vperm.xlu0 %881, %v879
        %v883 = vpop.permute.xlu0 %882
        %vm885 = vcmask 31744
        %v887 = vsel %vm885, %v878, 0
        %v890 = vsel %vm592, %v874, 0
        %v893 = vsel %vm592, %v876, 0
        %895 = vmatprep.subr.mxu0 0.0
        %896 = vmatpush1.msra.mxu0 0.0
        %897 = vmatprep.subr.mxu0 0.0
        %898 = vmatpush1.msra.mxu0 0.0
        %899 = vmatprep.subr.mxu0 0.0
        %900 = vmatpush1.msra.mxu0 0.0
        %901 = vmatprep.subr.mxu0 0.0
        %902 = vmatpush1.msra.mxu0 0.0
        %903 = vmatprep.subr.mxu0 0.0
        %904 = vmatpush1.msra.mxu0 0.0
        %905 = vmatprep.subr.mxu0 0.0
        %906 = vmatpush1.msra.mxu0 0.0
        %907 = vmatprep.subr.mxu0 0.0
        %908 = vmatpush1.msra.mxu0 0.0
        %909 = vmatprep.subr.mxu0 0.0
        %910 = vmatpush1.msra.mxu0 0.0
        %911 = vmatprep.subr.mxu0 0.0
        %912 = vmatpush1.msra.mxu0 0.0
        %913 = vmatprep.subr.mxu0 0.0
        %914 = vmatpush1.msra.mxu0 0.0
        %915 = vmatprep.subr.mxu0 0.0
        %916 = vmatpush1.msra.mxu0 0.0
        %917 = vmatprep.subr.mxu0 0.0
        %918 = vmatpush1.msra.mxu0 0.0
        %919 = vmatprep.subr.mxu0 0.0
        %920 = vmatpush1.msra.mxu0 0.0
        %921 = vmatprep.subr.mxu0 0.0
        %922 = vmatpush1.msra.mxu0 0.0
        %923 = vmatprep.subr.mxu0 0.0
        %924 = vmatpush1.msra.mxu0 0.0
        %925 = vmatprep.subr.mxu0 %v893
        %926 = vmatpush1.msra.mxu0 %v890
        %927 = vmatprep.subr.mxu0 0.0
        %928 = vmatpush2.msra.mxu0 0.0
        %929 = vmatprep.subr.mxu0 0.0
        %930 = vmatpush2.msra.mxu0 0.0
        %931 = vmatprep.subr.mxu0 0.0
        %932 = vmatpush2.msra.mxu0 0.0
        %933 = vmatprep.subr.mxu0 0.0
        %934 = vmatpush2.msra.mxu0 0.0
        %935 = vmatprep.subr.mxu0 0.0
        %936 = vmatpush2.msra.mxu0 0.0
        %937 = vmatprep.subr.mxu0 0.0
        %938 = vmatpush2.msra.mxu0 0.0
        %939 = vmatprep.subr.mxu0 0.0
        %940 = vmatpush2.msra.mxu0 0.0
        %941 = vmatprep.subr.mxu0 0.0
        %942 = vmatpush2.msra.mxu0 0.0
        %943 = vmatprep.subr.mxu0 0.0
        %944 = vmatpush2.msra.mxu0 0.0
        %945 = vmatprep.subr.mxu0 0.0
        %946 = vmatpush2.msra.mxu0 0.0
        %947 = vmatprep.subr.mxu0 0.0
        %948 = vmatpush2.msra.mxu0 0.0
        %949 = vmatprep.subr.mxu0 0.0
        %950 = vmatpush2.msra.mxu0 0.0
        %951 = vmatprep.subr.mxu0 0.0
        %952 = vmatpush2.msra.mxu0 0.0
        %953 = vmatprep.subr.mxu0 0.0
        %954 = vmatpush2.msra.mxu0 0.0
        %955 = vmatprep.subr.mxu0 0.0
        %956 = vmatpush2.msra.mxu0 0.0
        %957 = vmatprep.subr.mxu0 0.0
        %958 = vmatpush2.msra.mxu0 0.0
        %959 = vmatprep.mubr.f32.mxu0 0.0
        %960 = vmatmul.mubr.f32.gmra.mxu0 %v887
        %v961 = vpop.f32.mrf.mxu0
        %v962 = vadd.f32 %v883, %v961
        %v963 = vpop.f32.mrf.mxu0
        %v964 = vadd.f32 %v883, %v963
        %965 = vdwg.mxu0
        %vm966 = vcmask 1042434
        %v967 = vsel %vm966, %v962, -inf
        %v968 = vsel %vm966, %v964, -inf
        %v969 = vmax.f32 %v967, %v968
        %970 = vmax.xlane.f32.xlu0 %v969
        %v971 = vpop.xlane.xlu0 %970
        %v972 = vsub.f32 %v962, %v971
        %v973 = vsub.f32 %v964, %v971
        %v974 = vmul.f32 %v972, 1.442695
        %v975 = vpow.pop %v974
        %v976 = vmul.f32 %v973, 1.442695
        %v977 = vpow.pop %v976
        %v978 = vsel %vm966, %v975, 0.0
        %v979 = vsel %vm966, %v977, 0.0
        %v980 = vadd.f32 %v978, %v979
        %981 = vadd.xlane.f32.xlu0 %v980
        %v982 = vpop.xlane.xlu0 %981
        %v983 = vrcp.pop %v982
        %v984 = vmul.f32 %v975, %v983
        %v985 = vmul.f32 %v977, %v983
        %v986 = vlaneseq
        %v987 = vshrl.u32 %v986, 7
        %v988 = vsub.s32 2, %v987
        %v989 = vrot.slane %v984, %v988
        %v990 = vlaneseq
        %v991 = vshrl.u32 %v990, 7
        %v992 = vsub.s32 2, %v991
        %v993 = vrot.slane %v985, %v992
        %v994 = vmul.f32 %v962, %v989
        %v995 = vmul.f32 %v964, %v993
        %vm996 = vcmask 1041408
        %v997 = vsel %vm996, %v994, 0.0
        %v998 = vsel %vm996, %v995, 0.0
        %v999 = vadd.f32 %v997, %v998
        %1000 = vadd.xlane.f32.xlu0 %v999
        %v1001 = vpop.xlane.xlu0 %1000
        %v1002 = vld [vmem:[%s7] sm:$0xf]
        %v1003 = vld [vmem:[%s8] sm:$0xf]
        %vm1004 = vcmask 15360
        %v1006 = vsel %vm1004, %v1002, 0
        %v1009 = vsel %vm996, %v1001, 0
        %1011 = vmatprep.subr.mxu0 0.0
        %1012 = vmatpush1.msra.mxu0 0.0
        %1013 = vmatprep.subr.mxu0 0.0
        %1014 = vmatpush1.msra.mxu0 0.0
        %1015 = vmatprep.subr.mxu0 0.0
        %1016 = vmatpush1.msra.mxu0 0.0
        %1017 = vmatprep.subr.mxu0 0.0
        %1018 = vmatpush1.msra.mxu0 0.0
        %1019 = vmatprep.subr.mxu0 0.0
        %1020 = vmatpush1.msra.mxu0 0.0
        %1021 = vmatprep.subr.mxu0 0.0
        %1022 = vmatpush1.msra.mxu0 0.0
        %1023 = vmatprep.subr.mxu0 0.0
        %1024 = vmatpush1.msra.mxu0 0.0
        %1025 = vmatprep.subr.mxu0 0.0
        %1026 = vmatpush1.msra.mxu0 0.0
        %1027 = vmatprep.subr.mxu0 0.0
        %1028 = vmatpush1.msra.mxu0 0.0
        %1029 = vmatprep.subr.mxu0 0.0
        %1030 = vmatpush1.msra.mxu0 0.0
        %1031 = vmatprep.subr.mxu0 0.0
        %1032 = vmatpush1.msra.mxu0 0.0
        %1033 = vmatprep.subr.mxu0 0.0
        %1034 = vmatpush1.msra.mxu0 0.0
        %1035 = vmatprep.subr.mxu0 0.0
        %1036 = vmatpush1.msra.mxu0 0.0
        %1037 = vmatprep.subr.mxu0 0.0
        %1038 = vmatpush1.msra.mxu0 0.0
        %1039 = vmatprep.subr.mxu0 0.0
        %1040 = vmatpush1.msra.mxu0 0.0
        %1041 = vmatprep.subr.mxu0 0.0
        %1042 = vmatpush1.msra.mxu0 %v1009
        %1043 = vmatprep.subr.mxu0 0.0
        %1044 = vmatpush2.msra.mxu0 0.0
        %1045 = vmatprep.subr.mxu0 0.0
        %1046 = vmatpush2.msra.mxu0 0.0
        %1047 = vmatprep.subr.mxu0 0.0
        %1048 = vmatpush2.msra.mxu0 0.0
        %1049 = vmatprep.subr.mxu0 0.0
        %1050 = vmatpush2.msra.mxu0 0.0
        %1051 = vmatprep.subr.mxu0 0.0
        %1052 = vmatpush2.msra.mxu0 0.0
        %1053 = vmatprep.subr.mxu0 0.0
        %1054 = vmatpush2.msra.mxu0 0.0
        %1055 = vmatprep.subr.mxu0 0.0
        %1056 = vmatpush2.msra.mxu0 0.0
        %1057 = vmatprep.subr.mxu0 0.0
        %1058 = vmatpush2.msra.mxu0 0.0
        %1059 = vmatprep.subr.mxu0 0.0
        %1060 = vmatpush2.msra.mxu0 0.0
        %1061 = vmatprep.subr.mxu0 0.0
        %1062 = vmatpush2.msra.mxu0 0.0
        %1063 = vmatprep.subr.mxu0 0.0
        %1064 = vmatpush2.msra.mxu0 0.0
        %1065 = vmatprep.subr.mxu0 0.0
        %1066 = vmatpush2.msra.mxu0 0.0
        %1067 = vmatprep.subr.mxu0 0.0
        %1068 = vmatpush2.msra.mxu0 0.0
        %1069 = vmatprep.subr.mxu0 0.0
        %1070 = vmatpush2.msra.mxu0 0.0
        %1071 = vmatprep.subr.mxu0 0.0
        %1072 = vmatpush2.msra.mxu0 0.0
        %1073 = vmatprep.subr.mxu0 0.0
        %1074 = vmatpush2.msra.mxu0 0.0
        %1075 = vmatprep.mubr.f32.mxu0 0.0
        %1076 = vmatmul.mubr.f32.gmra.mxu0 %v1006
        %v1077 = vpop.f32.mrf.mxu0
        %v1078 = vadd.f32 %v1003, %v1077
        %v1079 = vpop.f32.mrf.mxu0
        %1080 = vdwg.mxu0
        %1082 = vset.pattern.permute.xlu0 0
        %1083 = vperm.xlu0 %1082, %v1078
        %v1084 = vpop.permute.xlu0 %1083
        %v1086 = vmul.f32 %v1084, %v874
        %v1087 = vmul.f32 %v1084, %v876
        %vm1088 = vcmask 1046533
        %v1089 = vsel %vm1088, %v962, 0.0
        %v1090 = vsel %vm1088, %v964, 0.0
        %v1091 = vadd.f32 %v1089, %v1090
        %1092 = vadd.xlane.f32.xlu0 %v1091
        %v1093 = vpop.xlane.xlu0 %1092
        %v1094 = vmul.f32 %v1093, 0.00390625
        %v1095 = vsel %vm1088, %v1094, -inf
        %v1096 = vrot.slane %v1095, 4
        %v1097 = vmax.f32 %v1095, %v1096
        %v1098 = vrot.slane %v1097, 2
        %v1099 = vmax.f32 %v1097, %v1098
        %v1100 = vrot.slane %v1099, 1
        %v1101 = vmax.f32 %v1099, %v1100
        %v1102 = vsub.f32 %v1094, %v1101
        %v1103 = vmul.f32 %v1102, 1.442695
        %v1104 = vpow.pop %v1103
        %v1106 = vrot.slane %v1104, 5
        %v1108 = vsel %vm996, %v1106, 0.0
        %v1109 = vrot.slane %v1108, 4
        %v1110 = vadd.f32 %v1108, %v1109
        %v1111 = vrot.slane %v1110, 2
        %v1112 = vadd.f32 %v1110, %v1111
        %v1113 = vrot.slane %v1112, 1
        %v1114 = vadd.f32 %v1112, %v1113
        %v1115 = vrcp.pop %v1114
        %v1116 = vmul.f32 %v1104, %v1115
        %v1118 = vrot.slane %v1116, 2
        %v1120 = vmul.f32 %v962, %v1118
        %v1121 = vmul.f32 %v964, %v1118
        %v1124 = vrot.slane %v1120, 3
        %v1125 = vrot.slane %v1121, 3
        %v1128 = vsel %vm996, %v1124, 0.0
        %v1129 = vrot.slane %v1128, 4
        %v1130 = vadd.f32 %v1128, %v1129
        %v1131 = vrot.slane %v1130, 2
        %v1132 = vadd.f32 %v1130, %v1131
        %v1133 = vrot.slane %v1132, 1
        %v1134 = vadd.f32 %v1132, %v1133
        %v1135 = vsel %vm996, %v1125, 0.0
        %v1136 = vrot.slane %v1135, 4
        %v1137 = vadd.f32 %v1135, %v1136
        %v1138 = vrot.slane %v1137, 2
        %v1139 = vadd.f32 %v1137, %v1138
        %v1140 = vrot.slane %v1139, 1
        %v1141 = vadd.f32 %v1139, %v1140
        %v1142 = vmul.f32 %v1134, %v874
        %v1143 = vmul.f32 %v1141, %v876
        %v1144 = vadd.f32 %v1142, %v1086
        %v1145 = vadd.f32 %v1143, %v1087
        %v1146 = vld [vmem:[%s9] sm:$0xf]
        %v1147 = vld [vmem:[%s10] sm:$0xf]
        %1149 = vset.pattern.permute.xlu0 0
        %1150 = vperm.xlu0 %1149, %v1147
        %v1151 = vpop.permute.xlu0 %1150
        %v1154 = vsel %vm885, %v1146, 0
        %v1157 = vsel %vm592, %v1144, 0
        %v1160 = vsel %vm592, %v1145, 0
        %1162 = vmatprep.subr.mxu0 0.0
        %1163 = vmatpush1.msra.mxu0 0.0
        %1164 = vmatprep.subr.mxu0 0.0
        %1165 = vmatpush1.msra.mxu0 0.0
        %1166 = vmatprep.subr.mxu0 0.0
        %1167 = vmatpush1.msra.mxu0 0.0
        %1168 = vmatprep.subr.mxu0 0.0
        %1169 = vmatpush1.msra.mxu0 0.0
        %1170 = vmatprep.subr.mxu0 0.0
        %1171 = vmatpush1.msra.mxu0 0.0
        %1172 = vmatprep.subr.mxu0 0.0
        %1173 = vmatpush1.msra.mxu0 0.0
        %1174 = vmatprep.subr.mxu0 0.0
        %1175 = vmatpush1.msra.mxu0 0.0
        %1176 = vmatprep.subr.mxu0 0.0
        %1177 = vmatpush1.msra.mxu0 0.0
        %1178 = vmatprep.subr.mxu0 0.0
        %1179 = vmatpush1.msra.mxu0 0.0
        %1180 = vmatprep.subr.mxu0 0.0
        %1181 = vmatpush1.msra.mxu0 0.0
        %1182 = vmatprep.subr.mxu0 0.0
        %1183 = vmatpush1.msra.mxu0 0.0
        %1184 = vmatprep.subr.mxu0 0.0
        %1185 = vmatpush1.msra.mxu0 0.0
        %1186 = vmatprep.subr.mxu0 0.0
        %1187 = vmatpush1.msra.mxu0 0.0
        %1188 = vmatprep.subr.mxu0 0.0
        %1189 = vmatpush1.msra.mxu0 0.0
        %1190 = vmatprep.subr.mxu0 0.0
        %1191 = vmatpush1.msra.mxu0 0.0
        %1192 = vmatprep.subr.mxu0 %v1160
        %1193 = vmatpush1.msra.mxu0 %v1157
        %1194 = vmatprep.subr.mxu0 0.0
        %1195 = vmatpush2.msra.mxu0 0.0
        %1196 = vmatprep.subr.mxu0 0.0
        %1197 = vmatpush2.msra.mxu0 0.0
        %1198 = vmatprep.subr.mxu0 0.0
        %1199 = vmatpush2.msra.mxu0 0.0
        %1200 = vmatprep.subr.mxu0 0.0
        %1201 = vmatpush2.msra.mxu0 0.0
        %1202 = vmatprep.subr.mxu0 0.0
        %1203 = vmatpush2.msra.mxu0 0.0
        %1204 = vmatprep.subr.mxu0 0.0
        %1205 = vmatpush2.msra.mxu0 0.0
        %1206 = vmatprep.subr.mxu0 0.0
        %1207 = vmatpush2.msra.mxu0 0.0
        %1208 = vmatprep.subr.mxu0 0.0
        %1209 = vmatpush2.msra.mxu0 0.0
        %1210 = vmatprep.subr.mxu0 0.0
        %1211 = vmatpush2.msra.mxu0 0.0
        %1212 = vmatprep.subr.mxu0 0.0
        %1213 = vmatpush2.msra.mxu0 0.0
        %1214 = vmatprep.subr.mxu0 0.0
        %1215 = vmatpush2.msra.mxu0 0.0
        %1216 = vmatprep.subr.mxu0 0.0
        %1217 = vmatpush2.msra.mxu0 0.0
        %1218 = vmatprep.subr.mxu0 0.0
        %1219 = vmatpush2.msra.mxu0 0.0
        %1220 = vmatprep.subr.mxu0 0.0
        %1221 = vmatpush2.msra.mxu0 0.0
        %1222 = vmatprep.subr.mxu0 0.0
        %1223 = vmatpush2.msra.mxu0 0.0
        %1224 = vmatprep.subr.mxu0 0.0
        %1225 = vmatpush2.msra.mxu0 0.0
        %1226 = vmatprep.mubr.f32.mxu0 0.0
        %1227 = vmatmul.mubr.f32.gmra.mxu0 %v1154
        %v1228 = vpop.f32.mrf.mxu0
        %v1229 = vadd.f32 %v1151, %v1228
        %v1230 = vpop.f32.mrf.mxu0
        %v1231 = vadd.f32 %v1151, %v1230
        %1232 = vdwg.mxu0
        %vm1233 = vcmp.ge.f32.partialorder %v1229, 0.0
        %vm1234 = vcmp.ge.f32.partialorder %v1231, 0.0
        %v1235 = vmul.f32 %v1229, 0.2
        %v1236 = vmul.f32 %v1231, 0.2
        %v1237 = vsel %vm1233, %v1229, %v1235
        %v1238 = vsel %vm1234, %v1231, %v1236
        %v1239 = vld [vmem:[%s11] sm:$0xf]
        %v1240 = vld [vmem:[%s12] sm:$0xf]
        %1242 = vset.pattern.permute.xlu0 0
        %1243 = vperm.xlu0 %1242, %v1240
        %v1244 = vpop.permute.xlu0 %1243
        %v1247 = vsel %vm885, %v1239, 0
        %v1250 = vsel %vm592, %v1237, 0
        %v1253 = vsel %vm592, %v1238, 0
        %1255 = vmatprep.subr.mxu0 0.0
        %1256 = vmatpush1.msra.mxu0 0.0
        %1257 = vmatprep.subr.mxu0 0.0
        %1258 = vmatpush1.msra.mxu0 0.0
        %1259 = vmatprep.subr.mxu0 0.0
        %1260 = vmatpush1.msra.mxu0 0.0
        %1261 = vmatprep.subr.mxu0 0.0
        %1262 = vmatpush1.msra.mxu0 0.0
        %1263 = vmatprep.subr.mxu0 0.0
        %1264 = vmatpush1.msra.mxu0 0.0
        %1265 = vmatprep.subr.mxu0 0.0
        %1266 = vmatpush1.msra.mxu0 0.0
        %1267 = vmatprep.subr.mxu0 0.0
        %1268 = vmatpush1.msra.mxu0 0.0
        %1269 = vmatprep.subr.mxu0 0.0
        %1270 = vmatpush1.msra.mxu0 0.0
        %1271 = vmatprep.subr.mxu0 0.0
        %1272 = vmatpush1.msra.mxu0 0.0
        %1273 = vmatprep.subr.mxu0 0.0
        %1274 = vmatpush1.msra.mxu0 0.0
        %1275 = vmatprep.subr.mxu0 0.0
        %1276 = vmatpush1.msra.mxu0 0.0
        %1277 = vmatprep.subr.mxu0 0.0
        %1278 = vmatpush1.msra.mxu0 0.0
        %1279 = vmatprep.subr.mxu0 0.0
        %1280 = vmatpush1.msra.mxu0 0.0
        %1281 = vmatprep.subr.mxu0 0.0
        %1282 = vmatpush1.msra.mxu0 0.0
        %1283 = vmatprep.subr.mxu0 0.0
        %1284 = vmatpush1.msra.mxu0 0.0
        %1285 = vmatprep.subr.mxu0 %v1253
        %1286 = vmatpush1.msra.mxu0 %v1250
        %1287 = vmatprep.subr.mxu0 0.0
        %1288 = vmatpush2.msra.mxu0 0.0
        %1289 = vmatprep.subr.mxu0 0.0
        %1290 = vmatpush2.msra.mxu0 0.0
        %1291 = vmatprep.subr.mxu0 0.0
        %1292 = vmatpush2.msra.mxu0 0.0
        %1293 = vmatprep.subr.mxu0 0.0
        %1294 = vmatpush2.msra.mxu0 0.0
        %1295 = vmatprep.subr.mxu0 0.0
        %1296 = vmatpush2.msra.mxu0 0.0
        %1297 = vmatprep.subr.mxu0 0.0
        %1298 = vmatpush2.msra.mxu0 0.0
        %1299 = vmatprep.subr.mxu0 0.0
        %1300 = vmatpush2.msra.mxu0 0.0
        %1301 = vmatprep.subr.mxu0 0.0
        %1302 = vmatpush2.msra.mxu0 0.0
        %1303 = vmatprep.subr.mxu0 0.0
        %1304 = vmatpush2.msra.mxu0 0.0
        %1305 = vmatprep.subr.mxu0 0.0
        %1306 = vmatpush2.msra.mxu0 0.0
        %1307 = vmatprep.subr.mxu0 0.0
        %1308 = vmatpush2.msra.mxu0 0.0
        %1309 = vmatprep.subr.mxu0 0.0
        %1310 = vmatpush2.msra.mxu0 0.0
        %1311 = vmatprep.subr.mxu0 0.0
        %1312 = vmatpush2.msra.mxu0 0.0
        %1313 = vmatprep.subr.mxu0 0.0
        %1314 = vmatpush2.msra.mxu0 0.0
        %1315 = vmatprep.subr.mxu0 0.0
        %1316 = vmatpush2.msra.mxu0 0.0
        %1317 = vmatprep.subr.mxu0 0.0
        %1318 = vmatpush2.msra.mxu0 0.0
        %1319 = vmatprep.mubr.f32.mxu0 0.0
        %1320 = vmatmul.mubr.f32.gmra.mxu0 %v1247
        %v1321 = vpop.f32.mrf.mxu0
        %v1322 = vadd.f32 %v1244, %v1321
        %v1323 = vpop.f32.mrf.mxu0
        %v1324 = vadd.f32 %v1244, %v1323
        %1325 = vdwg.mxu0
        %v1326 = vadd.f32 %v1322, %v874
        %v1327 = vadd.f32 %v1324, %v876
        %vm1328 = vcmp.ge.f32.partialorder %v1326, 0.0
        %vm1329 = vcmp.ge.f32.partialorder %v1327, 0.0
        %v1330 = vmul.f32 %v1326, 0.2
        %v1331 = vmul.f32 %v1327, 0.2
        %v1332 = vsel %vm1328, %v1326, %v1330
        %v1333 = vsel %vm1329, %v1327, %v1331
        %v1336 = vcombine.low %v1332, %v1333
        %v1338 = vadd.f32 %v439, %v1336
        %1339 = vst [vmem:[%s433] sm:$0xff] %v1338
        %s1340 = sand.u32 %s313, 1
        %s1341 = scalar_lea.sflag [#allocation3], %s1340
        %s1342 = sand.u32 %s313, 1
        %s1343 = smul.addr %s1342, 8
        %s1344 = scalar_lea.vmem [#allocation2], %s1343
        // Predicated region
        $region73: #{tpu_custom_call.1} parent=71 // pred_check
          %p1345 = pneg %p323
        $region74: #{tpu_custom_call.1} parent=71 // pred_check_branch
          %1347 = sbr.rel (%p1345) target = $region76
        $region75: #{tpu_custom_call.1} parent=71 // pred_region
          %s1349 = ssub.s32 128, 128
          %1350 = vsyncadd %s1341, %s1349
          %s1351 = smul.addr %s27, 2
          %s1352 = smul.addr %s1351, 64
          %s1353 = scalar_lea.hbm %s13, %s1352
          %s1355 = sshll.u32 %s1344, 4
          %s1356 = int_to_ptr.vmem [resolvable:$true] %s1355
          %1358 = dma.vmem_to_hbm [thread:$0]  %s1356, 128, %s1353, %s1341
        $region76: #{tpu_custom_call.1} parent=71 // pred_fallthru
          _
      $region72: #{tpu_custom_call.1} parent=5 // pred_fallthru
        _
      %p1359 = scmp.le.s32.totalorder 2, %s22
      // Predicated region
      $region77: #{tpu_custom_call.1} parent=5 // pred_check
        %p1360 = pneg %p1359
      $region78: #{tpu_custom_call.1} parent=5 // pred_check_branch
        %1362 = sbr.rel (%p1360) target = $region80
      $region79: #{tpu_custom_call.1} parent=5 // pred_region
        %s1363 = ssub.s32 %s22, 2
        // Predicated region
        $region81: #{tpu_custom_call.1} parent=79 // pred_check
          %p1364 = pneg %p329
        $region82: #{tpu_custom_call.1} parent=79 // pred_check_branch
          %1366 = sbr.rel (%p1364) target = $region84
        $region83: #{tpu_custom_call.1} parent=79 // pred_region
          %s1367 = sand.u32 %s314, 1
          %s1368 = scalar_lea.sflag [#allocation3], %s1367
          %s1369 = sand.u32 %s314, 1
          %s1370 = smul.addr %s1369, 8
          %s1371 = scalar_lea.vmem [#allocation2], %s1370
          %1372 = dma.done %s1368, 128
        $region84: #{tpu_custom_call.1} parent=79 // pred_fallthru
          _
      $region80: #{tpu_custom_call.1} parent=5 // pred_fallthru
        _
    $region6: #{tpu_custom_call.1} parent=1 // loop_footer
      %s26 = sadd.s32 1, %s22
    $region7: #{tpu_custom_call.1} parent=1 // loop_footer_branch
      %21 = sbr.rel target = $region3
    $region8: #{tpu_custom_call.1} parent=1 // loop_exit
      _
    %1373 = vsyncpa [#allocation3], 1
    %s1374 = scalar_lea.sflag [#allocation3], 1
    %1375 = vsyncpa %s1374, 1

</llo_original>
